<compile_context>
chip_gen: v7x
topology: tpu7x:2x2x1
jax: 0.10.0
libtpu: 0.0.40
codegen_flags: <defaults>
</compile_context>

<pallas_src>
import jax
import jax.numpy as jnp
from jax.experimental import pallas as pl
from jax.experimental.pallas import tpu as pltpu

N_PAD = 128  # lane-dense output width for every matmul in the net


# ---------------------------------------------------------------------------
# Hardware-aware tiling helpers
# ---------------------------------------------------------------------------
def _num_parallel_tensorcores():
    """TensorCores a 'parallel' grid axis can be sharded across on this chip."""
    try:
        kind = jax.devices()[0].device_kind.lower()
    except Exception:  # never let detection break the kernel
        return 1
    # 1-TC-per-device chips (v2/v3 expose one core per device; v5e/v6e are 1 TC):
    if any(s in kind for s in ("v2", "v3", "lite", "v5e", "v6e")):
        return 1
    # v4 / v5p megacore and v7x (2 TC per chip): split M across two parallel blocks.
    return 2


def _pick_tile_m(m, cores):
    """Full-M block on single-TC chips; ~M/cores (multiple of 16) on 2-TC chips."""
    if cores <= 1:
        return m
    tm = -(-m // cores)          # ceil(m / cores)
    tm = -(-tm // 16) * 16       # bf16 blocks: keep sublane dim a multiple of 16
    return min(tm, m)


# ---------------------------------------------------------------------------
# Fused matmul + bias + ReLU kernel (both convs, via im2col)
# ---------------------------------------------------------------------------
def _conv_matmul_kernel(x_ref, w_ref, b_ref, o_ref):
    # x: (tm, Kpad) bf16, w: (Kpad, 128) bf16, b: (1, 128) f32, o: (tm, 128) bf16
    acc = jnp.dot(x_ref[...], w_ref[...], preferred_element_type=jnp.float32)
    acc = acc + b_ref[...]                       # f32 epilogue: bias + ReLU
    o_ref[...] = jnp.maximum(acc, 0.0).astype(o_ref.dtype)   # bf16 store (half the bytes)


def matmul_bias_relu(x, w, b):
    """relu(x @ w + b); x (M,Kpad) bf16, w (Kpad,128) bf16, b (1,128) f32 -> (M,128) bf16."""
    m, k_pad = x.shape
    n_pad = w.shape[1]

    cores = _num_parallel_tensorcores()
    tm = _pick_tile_m(m, cores)
    grid_m = pl.cdiv(m, tm)      # ragged tail block is masked by Pallas (harmless epilogue)

    cost = pl.CostEstimate(
        flops=2 * m * k_pad * n_pad,
        transcendentals=0,
        bytes_accessed=m * k_pad * 2 + k_pad * n_pad * 2 + n_pad * 4 + m * n_pad * 2,
    )

    # Per-step VMEM (double-buffered) stays ~1 MiB even at full M, so the same
    # tiling is safe on v7x (64 MiB VMEM) as well as v5e/v6e.
    return pl.pallas_call(
        _conv_matmul_kernel,
        out_shape=jax.ShapeDtypeStruct((m, n_pad), jnp.bfloat16),
        grid=(grid_m,),
        in_specs=[
            pl.BlockSpec((tm, k_pad), lambda i: (i, 0)),
            pl.BlockSpec((k_pad, n_pad), lambda i: (0, 0)),  # same block every step
            pl.BlockSpec((1, n_pad), lambda i: (0, 0)),
        ],
        out_specs=pl.BlockSpec((tm, n_pad), lambda i: (i, 0)),
        compiler_params=pltpu.CompilerParams(dimension_semantics=("parallel",)),
        cost_estimate=cost,
    )(x, w, b)


# ---------------------------------------------------------------------------
# Conv via im2col (NHWC, bf16 patches, K zero-padded) + Pallas matmul
# ---------------------------------------------------------------------------
def _im2col_nhwc(x, k, k_pad):
    """x NHWC (bf16). Returns (B*OH*OW, Kpad) patches, feature order (kh*K+kw)*C+c."""
    b, h, w, c = x.shape
    oh, ow = h - k + 1, w - k + 1
    cols = [x[:, kh:kh + oh, kw:kw + ow, :] for kh in range(k) for kw in range(k)]
    kk = k * k * c
    if k_pad > kk:  # zero-pad the contraction dim inside the same concatenate
        cols.append(jnp.zeros((b, oh, ow, k_pad - kk), x.dtype))
    patches = jnp.concatenate(cols, axis=-1)              # (B, OH, OW, Kpad) bf16
    return patches.reshape(b * oh * ow, k_pad), oh, ow


def conv2d_relu(x, w_packed, b_packed, *, out_ch, ksize):
    """x: NHWC bf16; w_packed: (Kpad,128) bf16; b_packed: (1,128) f32 -> NHWC bf16."""
    bsz = x.shape[0]
    k_pad = w_packed.shape[0]
    patches, oh, ow = _im2col_nhwc(x, ksize, k_pad)
    y = matmul_bias_relu(patches, w_packed, b_packed)      # (B*OH*OW, 128) bf16
    return y.reshape(bsz, oh, ow, N_PAD)[..., :out_ch]     # NHWC, no transpose


def maxpool2x2(x):
    """2x2 / stride-2 max pool on NHWC via strided slices (XLA fuses; no extra kernel)."""
    return jnp.maximum(
        jnp.maximum(x[:, 0::2, 0::2, :], x[:, 0::2, 1::2, :]),
        jnp.maximum(x[:, 1::2, 0::2, :], x[:, 1::2, 1::2, :]),
    )


# ---------------------------------------------------------------------------
# Fused FC head: fc1 -> relu -> fc2 -> relu -> fc3 in one pallas_call
# ---------------------------------------------------------------------------
def _fc_head_kernel(x_ref, w1_ref, b1_ref, w2_ref, b2_ref, w3_ref, b3_ref, o_ref):
    # bf16 MXU inputs, f32 accumulation, lane-dense (128-wide) intermediates.
    h = jnp.dot(x_ref[...], w1_ref[...], preferred_element_type=jnp.float32) + b1_ref[...]
    h = jnp.maximum(h, 0.0).astype(jnp.bfloat16)
    h = jnp.dot(h, w2_ref[...], preferred_element_type=jnp.float32) + b2_ref[...]
    h = jnp.maximum(h, 0.0).astype(jnp.bfloat16)
    h = jnp.dot(h, w3_ref[...], preferred_element_type=jnp.float32) + b3_ref[...]
    o_ref[...] = h.astype(o_ref.dtype)


def fc_head(x, p):
    """x: (B, 400) bf16 (NHWC flatten order; fc1 weight pre-permuted to match)."""
    bsz = x.shape[0]
    out = pl.pallas_call(
        _fc_head_kernel,
        out_shape=jax.ShapeDtypeStruct((bsz, N_PAD), jnp.float32),
    )(x, p["f1_w"], p["f1_b"], p["f2_w"], p["f2_b"], p["f3_w"], p["f3_b"])
    return out[:, :10]          # fc3 has 10 real outputs; padded lanes are zero


# ---------------------------------------------------------------------------
# One-time weight prepacking (outside the jitted forward)
# ---------------------------------------------------------------------------
def _pack_conv(w, b):
    out_ch, in_ch, k, _ = w.shape
    kk = k * k * in_ch
    k_pad = ((kk + 127) // 128) * 128
    # (kh, kw, c) feature order, matching _im2col_nhwc's concat order.
    wm = w.transpose(2, 3, 1, 0).reshape(kk, out_ch)
    wm = jnp.pad(wm, ((0, k_pad - kk), (0, N_PAD - out_ch))).astype(jnp.bfloat16)
    bm = jnp.pad(b.astype(jnp.float32), (0, N_PAD - out_ch)).reshape(1, N_PAD)
    return wm, bm


def _pack_fc(w, b, k_pad):
    out_f, in_f = w.shape
    wt = jnp.pad(w.T, ((0, k_pad - in_f), (0, N_PAD - out_f))).astype(jnp.bfloat16)
    bt = jnp.pad(b.astype(jnp.float32), (0, N_PAD - out_f)).reshape(1, N_PAD)
    return wt, bt


def pack_params(p):
    """Repack torch-layout params into the (padded, bf16) layouts the kernels want."""
    packed = {}
    packed["c1_w"], packed["c1_b"] = _pack_conv(p["conv1_w"], p["conv1_b"])   # (128,128)
    packed["c2_w"], packed["c2_b"] = _pack_conv(p["conv2_w"], p["conv2_b"])   # (256,128)
    # Re-order fc1 columns from NCHW-flatten (c,h,w) to NHWC-flatten (h,w,c) so the
    # conv2 output can be flattened directly in NHWC (same math as torch.flatten).
    fc1 = p["fc1_w"].reshape(120, 16, 5, 5).transpose(0, 2, 3, 1).reshape(120, 400)
    packed["f1_w"], packed["f1_b"] = _pack_fc(fc1, p["fc1_b"], k_pad=400)     # (400,128)
    packed["f2_w"], packed["f2_b"] = _pack_fc(p["fc2_w"], p["fc2_b"], k_pad=128)
    packed["f3_w"], packed["f3_b"] = _pack_fc(p["fc3_w"], p["fc3_b"], k_pad=128)
    return packed


# ---------------------------------------------------------------------------
# Net forward (mirrors the PyTorch module; external interface is NCHW f32)
# ---------------------------------------------------------------------------
def net_forward(packed, x_nchw):
    x = jnp.transpose(x_nchw, (0, 2, 3, 1)).astype(jnp.bfloat16)   # NCHW->NHWC + bf16, once
    x = maxpool2x2(conv2d_relu(x, packed["c1_w"], packed["c1_b"], out_ch=6, ksize=5))
    x = maxpool2x2(conv2d_relu(x, packed["c2_w"], packed["c2_b"], out_ch=16, ksize=5))
    x = x.reshape(x.shape[0], -1)            # NHWC flatten; fc1_w pre-permuted to match
    return fc_head(x, packed)                # (B, 10) f32


def init_params(key, in_channels=3):
    ks = jax.random.split(key, 10)

    def u(k, shape, fan_in):
        bound = 1.0 / jnp.sqrt(fan_in)
        return jax.random.uniform(k, shape, jnp.float32, -bound, bound)

    return {
        "conv1_w": u(ks[0], (6, in_channels, 5, 5), in_channels * 25),
        "conv1_b": u(ks[1], (6,), in_channels * 25),
        "conv2_w": u(ks[2], (16, 6, 5, 5), 6 * 25),
        "conv2_b": u(ks[3], (16,), 6 * 25),
        "fc1_w": u(ks[4], (120, 16 * 5 * 5), 400),
        "fc1_b": u(ks[5], (120,), 400),
        "fc2_w": u(ks[6], (84, 120), 120),
        "fc2_b": u(ks[7], (84,), 120),
        "fc3_w": u(ks[8], (10, 84), 84),
        "fc3_b": u(ks[9], (10,), 84),
    }


if __name__ == "__main__":
    # Input must be 32x32 so that 16*5*5 features reach fc1 (as the module implies).
    key = jax.random.PRNGKey(0)
    k_x, k_p = jax.random.split(key)
    x = jax.random.normal(k_x, (2, 3, 32, 32), dtype=jnp.float32)   # NCHW, batch=2
    params = init_params(k_p, in_channels=3)
    packed = pack_params(params)            # one-time repack, outside the jitted forward

    out = jax.jit(net_forward)(packed, x)
    out = jax.block_until_ready(out)
    assert out.shape == (2, 10), out.shape
    print("KERNEL_OK")
</pallas_src>

<mosaic_0001>
module attributes {stable_mosaic.version = 11 : i64} {
  func.func @_conv_matmul_kernel(%arg0: i32, %arg1: memref<784x128xbf16, #tpu.memory_space<vmem>>, %arg2: memref<128x128xbf16, #tpu.memory_space<vmem>>, %arg3: memref<1x128xf32, #tpu.memory_space<vmem>>, %arg4: memref<784x128xbf16, #tpu.memory_space<vmem>>) attributes {dimension_semantics = [#tpu.dimension_semantics<parallel>], iteration_bounds = array<i64: 2>, scalar_prefetch = 0 : i64, scratch_operands = 0 : i64, tpu.core_type = #tpu.core_type<tc>, window_params = [{transform_indices = @transform_0, window_bounds = array<i64: 784, 128>}, {pipeline_mode = #tpu.pipeline_mode<synchronous>, transform_indices = @transform_1, window_bounds = array<i64: 128, 128>}, {pipeline_mode = #tpu.pipeline_mode<synchronous>, transform_indices = @transform_2, window_bounds = array<i64: 1, 128>}, {transform_indices = @transform_3, window_bounds = array<i64: 784, 128>}]} {
    %c0 = arith.constant 0 : index
    %c0_0 = arith.constant 0 : index
    %0 = vector.load %arg1[%c0, %c0_0] : memref<784x128xbf16, #tpu.memory_space<vmem>>, vector<784x128xbf16>
    %c0_1 = arith.constant 0 : index
    %c0_2 = arith.constant 0 : index
    %1 = vector.load %arg2[%c0_1, %c0_2] : memref<128x128xbf16, #tpu.memory_space<vmem>>, vector<128x128xbf16>
    %cst = arith.constant dense<0.000000e+00> : vector<784x128xf32>
    %2 = tpu.matmul %0, %1, %cst {dimension_numbers = #tpu.dot_dimension_numbers<[1], [0], [0], [1], [0, 0, 1, 1], [], []>} : vector<784x128xbf16>, vector<128x128xbf16>, vector<784x128xf32> -> vector<784x128xf32>
    %c0_3 = arith.constant 0 : index
    %c0_4 = arith.constant 0 : index
    %3 = vector.load %arg3[%c0_3, %c0_4] : memref<1x128xf32, #tpu.memory_space<vmem>>, vector<1x128xf32>
    %4 = vector.broadcast %3 : vector<1x128xf32> to vector<784x128xf32>
    %5 = arith.addf %2, %4 : vector<784x128xf32>
    %cst_5 = arith.constant 0.000000e+00 : f32
    %6 = vector.broadcast %cst_5 : f32 to vector<784x128xf32>
    %7 = arith.maximumf %5, %6 : vector<784x128xf32>
    %8 = arith.truncf %7 : vector<784x128xf32> to vector<784x128xbf16>
    %c0_6 = arith.constant 0 : index
    %c0_7 = arith.constant 0 : index
    %9 = vector.load %arg4[%c0_6, %c0_7] : memref<784x128xbf16, #tpu.memory_space<vmem>>, vector<784x128xbf16>
    tpu.vector_store %arg4[%c0_6, %c0_7], %8 {strides = array<i32>} : memref<784x128xbf16, #tpu.memory_space<vmem>>, vector<784x128xbf16>,
    return
  }
  func.func @transform_0(%arg0: i32) -> (i32, i32) {
    %c0_i32 = arith.constant 0 : i32
    %c0_i32_0 = arith.constant 0 : i32
    return %arg0, %c0_i32 : i32, i32
  }
  func.func @transform_1(%arg0: i32) -> (i32, i32) {
    %c0_i32 = arith.constant 0 : i32
    %c0_i32_0 = arith.constant 0 : i32
    %c0_i32_1 = arith.constant 0 : i32
    return %c0_i32, %c0_i32_0 : i32, i32
  }
  func.func @transform_2(%arg0: i32) -> (i32, i32) {
    %c0_i32 = arith.constant 0 : i32
    %c0_i32_0 = arith.constant 0 : i32
    %c0_i32_1 = arith.constant 0 : i32
    return %c0_i32, %c0_i32_0 : i32, i32
  }
  func.func @transform_3(%arg0: i32) -> (i32, i32) {
    %c0_i32 = arith.constant 0 : i32
    %c0_i32_0 = arith.constant 0 : i32
    return %arg0, %c0_i32 : i32, i32
  }
}

module attributes {stable_mosaic.version = 11 : i64} {
  func.func @_conv_matmul_kernel(%arg0: i32, %arg1: memref<112x256xbf16, #tpu.memory_space<vmem>>, %arg2: memref<256x128xbf16, #tpu.memory_space<vmem>>, %arg3: memref<1x128xf32, #tpu.memory_space<vmem>>, %arg4: memref<112x128xbf16, #tpu.memory_space<vmem>>) attributes {dimension_semantics = [#tpu.dimension_semantics<parallel>], iteration_bounds = array<i64: 2>, scalar_prefetch = 0 : i64, scratch_operands = 0 : i64, tpu.core_type = #tpu.core_type<tc>, window_params = [{transform_indices = @transform_0, window_bounds = array<i64: 112, 256>}, {pipeline_mode = #tpu.pipeline_mode<synchronous>, transform_indices = @transform_1, window_bounds = array<i64: 256, 128>}, {pipeline_mode = #tpu.pipeline_mode<synchronous>, transform_indices = @transform_2, window_bounds = array<i64: 1, 128>}, {transform_indices = @transform_3, window_bounds = array<i64: 112, 128>}]} {
    %c0 = arith.constant 0 : index
    %c0_0 = arith.constant 0 : index
    %0 = vector.load %arg1[%c0, %c0_0] : memref<112x256xbf16, #tpu.memory_space<vmem>>, vector<112x256xbf16>
    %c0_1 = arith.constant 0 : index
    %c0_2 = arith.constant 0 : index
    %1 = vector.load %arg2[%c0_1, %c0_2] : memref<256x128xbf16, #tpu.memory_space<vmem>>, vector<256x128xbf16>
    %cst = arith.constant dense<0.000000e+00> : vector<112x128xf32>
    %2 = tpu.matmul %0, %1, %cst {dimension_numbers = #tpu.dot_dimension_numbers<[1], [0], [0], [1], [0, 0, 1, 1], [], []>} : vector<112x256xbf16>, vector<256x128xbf16>, vector<112x128xf32> -> vector<112x128xf32>
    %c0_3 = arith.constant 0 : index
    %c0_4 = arith.constant 0 : index
    %3 = vector.load %arg3[%c0_3, %c0_4] : memref<1x128xf32, #tpu.memory_space<vmem>>, vector<1x128xf32>
    %4 = vector.broadcast %3 : vector<1x128xf32> to vector<112x128xf32>
    %5 = arith.addf %2, %4 : vector<112x128xf32>
    %cst_5 = arith.constant 0.000000e+00 : f32
    %6 = vector.broadcast %cst_5 : f32 to vector<112x128xf32>
    %7 = arith.maximumf %5, %6 : vector<112x128xf32>
    %8 = arith.truncf %7 : vector<112x128xf32> to vector<112x128xbf16>
    %c0_6 = arith.constant 0 : index
    %c0_7 = arith.constant 0 : index
    %9 = vector.load %arg4[%c0_6, %c0_7] : memref<112x128xbf16, #tpu.memory_space<vmem>>, vector<112x128xbf16>
    tpu.vector_store %arg4[%c0_6, %c0_7], %8 {strides = array<i32>} : memref<112x128xbf16, #tpu.memory_space<vmem>>, vector<112x128xbf16>,
    return
  }
  func.func @transform_0(%arg0: i32) -> (i32, i32) {
    %c0_i32 = arith.constant 0 : i32
    %c0_i32_0 = arith.constant 0 : i32
    return %arg0, %c0_i32 : i32, i32
  }
  func.func @transform_1(%arg0: i32) -> (i32, i32) {
    %c0_i32 = arith.constant 0 : i32
    %c0_i32_0 = arith.constant 0 : i32
    %c0_i32_1 = arith.constant 0 : i32
    return %c0_i32, %c0_i32_0 : i32, i32
  }
  func.func @transform_2(%arg0: i32) -> (i32, i32) {
    %c0_i32 = arith.constant 0 : i32
    %c0_i32_0 = arith.constant 0 : i32
    %c0_i32_1 = arith.constant 0 : i32
    return %c0_i32, %c0_i32_0 : i32, i32
  }
  func.func @transform_3(%arg0: i32) -> (i32, i32) {
    %c0_i32 = arith.constant 0 : i32
    %c0_i32_0 = arith.constant 0 : i32
    return %arg0, %c0_i32 : i32, i32
  }
}

module attributes {stable_mosaic.version = 11 : i64} {
  func.func @_fc_head_kernel(%arg0: memref<2x400xbf16, #tpu.memory_space<vmem>>, %arg1: memref<400x128xbf16, #tpu.memory_space<vmem>>, %arg2: memref<1x128xf32, #tpu.memory_space<vmem>>, %arg3: memref<128x128xbf16, #tpu.memory_space<vmem>>, %arg4: memref<1x128xf32, #tpu.memory_space<vmem>>, %arg5: memref<128x128xbf16, #tpu.memory_space<vmem>>, %arg6: memref<1x128xf32, #tpu.memory_space<vmem>>, %arg7: memref<2x128xf32, #tpu.memory_space<vmem>>) attributes {dimension_semantics = [], scalar_prefetch = 0 : i64, scratch_operands = 0 : i64, tpu.core_type = #tpu.core_type<tc>} {
    %c0 = arith.constant 0 : index
    %c0_0 = arith.constant 0 : index
    %0 = vector.load %arg0[%c0, %c0_0] : memref<2x400xbf16, #tpu.memory_space<vmem>>, vector<2x400xbf16>
    %c0_1 = arith.constant 0 : index
    %c0_2 = arith.constant 0 : index
    %1 = vector.load %arg1[%c0_1, %c0_2] : memref<400x128xbf16, #tpu.memory_space<vmem>>, vector<400x128xbf16>
    %cst = arith.constant dense<0.000000e+00> : vector<2x128xf32>
    %2 = tpu.matmul %0, %1, %cst {dimension_numbers = #tpu.dot_dimension_numbers<[1], [0], [0], [1], [0, 0, 1, 1], [], []>} : vector<2x400xbf16>, vector<400x128xbf16>, vector<2x128xf32> -> vector<2x128xf32>
    %c0_3 = arith.constant 0 : index
    %c0_4 = arith.constant 0 : index
    %3 = vector.load %arg2[%c0_3, %c0_4] : memref<1x128xf32, #tpu.memory_space<vmem>>, vector<1x128xf32>
    %4 = vector.broadcast %3 : vector<1x128xf32> to vector<2x128xf32>
    %5 = arith.addf %2, %4 : vector<2x128xf32>
    %cst_5 = arith.constant 0.000000e+00 : f32
    %6 = vector.broadcast %cst_5 : f32 to vector<2x128xf32>
    %7 = arith.maximumf %5, %6 : vector<2x128xf32>
    %8 = arith.truncf %7 : vector<2x128xf32> to vector<2x128xbf16>
    %c0_6 = arith.constant 0 : index
    %c0_7 = arith.constant 0 : index
    %9 = vector.load %arg3[%c0_6, %c0_7] : memref<128x128xbf16, #tpu.memory_space<vmem>>, vector<128x128xbf16>
    %cst_8 = arith.constant dense<0.000000e+00> : vector<2x128xf32>
    %10 = tpu.matmul %8, %9, %cst_8 {dimension_numbers = #tpu.dot_dimension_numbers<[1], [0], [0], [1], [0, 0, 1, 1], [], []>} : vector<2x128xbf16>, vector<128x128xbf16>, vector<2x128xf32> -> vector<2x128xf32>
    %c0_9 = arith.constant 0 : index
    %c0_10 = arith.constant 0 : index
    %11 = vector.load %arg4[%c0_9, %c0_10] : memref<1x128xf32, #tpu.memory_space<vmem>>, vector<1x128xf32>
    %12 = vector.broadcast %11 : vector<1x128xf32> to vector<2x128xf32>
    %13 = arith.addf %10, %12 : vector<2x128xf32>
    %cst_11 = arith.constant 0.000000e+00 : f32
    %14 = vector.broadcast %cst_11 : f32 to vector<2x128xf32>
    %15 = arith.maximumf %13, %14 : vector<2x128xf32>
    %16 = arith.truncf %15 : vector<2x128xf32> to vector<2x128xbf16>
    %c0_12 = arith.constant 0 : index
    %c0_13 = arith.constant 0 : index
    %17 = vector.load %arg5[%c0_12, %c0_13] : memref<128x128xbf16, #tpu.memory_space<vmem>>, vector<128x128xbf16>
    %cst_14 = arith.constant dense<0.000000e+00> : vector<2x128xf32>
    %18 = tpu.matmul %16, %17, %cst_14 {dimension_numbers = #tpu.dot_dimension_numbers<[1], [0], [0], [1], [0, 0, 1, 1], [], []>} : vector<2x128xbf16>, vector<128x128xbf16>, vector<2x128xf32> -> vector<2x128xf32>
    %c0_15 = arith.constant 0 : index
    %c0_16 = arith.constant 0 : index
    %19 = vector.load %arg6[%c0_15, %c0_16] : memref<1x128xf32, #tpu.memory_space<vmem>>, vector<1x128xf32>
    %20 = vector.broadcast %19 : vector<1x128xf32> to vector<2x128xf32>
    %21 = arith.addf %18, %20 : vector<2x128xf32>
    %c0_17 = arith.constant 0 : index
    %c0_18 = arith.constant 0 : index
    %22 = vector.load %arg7[%c0_17, %c0_18] : memref<2x128xf32, #tpu.memory_space<vmem>>, vector<2x128xf32>
    tpu.vector_store %arg7[%c0_17, %c0_18], %21 {strides = array<i32>} : memref<2x128xf32, #tpu.memory_space<vmem>>, vector<2x128xf32>,
    return
  }
}

</mosaic_0001>

<llo_original>
// kernel: net_forward.3
$region0: #{net_forward.3}
  #allocation0 [shape = 'u32[]', space=smem, size = 0x4, offset = 0x4, fixed_abs, tag = 'smem constant byte address 0x4 - core index']
  #allocation1 [shape = 'u32[144,128]{1,0:T(1,128)}', space=vmem, size = 0x12000, scoped, tag = 'internal scratch']
  %s0 = inlined_call_operand.vmem [shape: bf16[1568,128], index: 0, kind: input, shape index: {}]
  %s1 = inlined_call_operand.vmem [shape: bf16[128,128], index: 1, kind: input, shape index: {}]
  %s2 = inlined_call_operand.vmem [shape: f32[1,128], index: 2, kind: input, shape index: {}]
  %s3 = inlined_call_operand.vmem [shape: bf16[1568,128], index: 3, kind: output, shape index: {}]
  %s4 = sld [smem:[#allocation0]]
  $region45: #{net_forward.3} parent=0
    _
  %s6 = ssub.s32 1, %s4
  %s7 = scalar_select 0, %s6, %s4
  loop: start=0, step=1, limit=4
  $region2: #{net_forward.3} parent=0 // loop_pre_header
    _
  $region3: #{net_forward.3} parent=0 // loop_header
    %s9 = sphi 0, %s13
    %p10 = scmp.ge.s32.totalorder %s9, 4
    %s19 = sphi 0, %s21
    %s22 = sphi 0, %s19
    %s23 = sphi 0, %s22
    %s39 = sphi 0, %s23
    %s43 = sphi 0, %s43
    %s45 = sphi 0, %s43
    %s46 = sphi 0, %s45
    %s60 = sphi 0, %s46
    %s64 = sphi 0, %s64
    %s66 = sphi 0, %s64
    %s67 = sphi 0, %s66
    %s81 = sphi 0, %s67
    %s87 = sphi 0, %s89
    %s90 = sphi 0, %s87
    %s91 = sphi 0, %s90
    %s107 = sphi 0, %s91
  $region4: #{net_forward.3} parent=0 // loop_header_branch
    %12 = sbr.rel (%p10) target = $region8
  $region5: #{net_forward.3} parent=0 // loop_body
    %s14 = ssub.s32 %s9, 1
    %s15 = ssub.s32 %s9, 2
    %s16 = sadd.s32 %s9, 1
    %s17 = ssub.s32 %s9, %s16
    %p18 = scmp.eq.s32.totalorder %s17, 0
    %s20 = sadd.s32 %s19, 1
    %s21 = scalar_select %p18, %s19, %s20
    %p24 = pneg %p18
    %p25 = scmp.eq.s32.totalorder %s9, 1
    %p26 = por %p24, %p25
    %p27 = scmp.ne.s32.totalorder %s19, %s22
    %p28 = scmp.eq.s32.totalorder %s9, 0
    %p29 = por %p27, %p28
    %p30 = scmp.ne.s32.totalorder %s19, %s22
    %p31 = scmp.eq.s32.totalorder %s14, 1
    %p32 = por %p30, %p31
    %p33 = scmp.ne.s32.totalorder %s22, %s23
    %p34 = scmp.eq.s32.totalorder %s14, 0
    %p35 = por %p33, %p34
    %p36 = scmp.ne.s32.totalorder %s22, %s23
    %p37 = scmp.eq.s32.totalorder %s15, 1
    %p38 = por %p36, %p37
    %p40 = scmp.ne.s32.totalorder %s23, %s39
    %p41 = scmp.eq.s32.totalorder %s15, 0
    %p42 = por %p40, %p41
    %s44 = sadd.s32 %s43, 1
    %p47 = scmp.eq.s32.totalorder %s9, 1
    %p48 = scmp.ne.s32.totalorder %s43, %s45
    %p49 = scmp.eq.s32.totalorder %s9, 0
    %p50 = por %p48, %p49
    %p51 = scmp.ne.s32.totalorder %s43, %s45
    %p52 = scmp.eq.s32.totalorder %s14, 1
    %p53 = por %p51, %p52
    %p54 = scmp.ne.s32.totalorder %s45, %s46
    %p55 = scmp.eq.s32.totalorder %s14, 0
    %p56 = por %p54, %p55
    %p57 = scmp.ne.s32.totalorder %s45, %s46
    %p58 = scmp.eq.s32.totalorder %s15, 1
    %p59 = por %p57, %p58
    %p61 = scmp.ne.s32.totalorder %s46, %s60
    %p62 = scmp.eq.s32.totalorder %s15, 0
    %p63 = por %p61, %p62
    %s65 = sadd.s32 %s64, 1
    %p68 = scmp.eq.s32.totalorder %s9, 1
    %p69 = scmp.ne.s32.totalorder %s64, %s66
    %p70 = scmp.eq.s32.totalorder %s9, 0
    %p71 = por %p69, %p70
    %p72 = scmp.ne.s32.totalorder %s64, %s66
    %p73 = scmp.eq.s32.totalorder %s14, 1
    %p74 = por %p72, %p73
    %p75 = scmp.ne.s32.totalorder %s66, %s67
    %p76 = scmp.eq.s32.totalorder %s14, 0
    %p77 = por %p75, %p76
    %p78 = scmp.ne.s32.totalorder %s66, %s67
    %p79 = scmp.eq.s32.totalorder %s15, 1
    %p80 = por %p78, %p79
    %p82 = scmp.ne.s32.totalorder %s67, %s81
    %p83 = scmp.eq.s32.totalorder %s15, 0
    %p84 = por %p82, %p83
    %s85 = ssub.s32 %s9, %s16
    %p86 = scmp.eq.s32.totalorder %s85, 0
    %s88 = sadd.s32 %s87, 1
    %s89 = scalar_select %p86, %s87, %s88
    %p92 = pneg %p86
    %p93 = scmp.eq.s32.totalorder %s9, 1
    %p94 = por %p92, %p93
    %p95 = scmp.ne.s32.totalorder %s87, %s90
    %p96 = scmp.eq.s32.totalorder %s9, 0
    %p97 = por %p95, %p96
    %p98 = scmp.ne.s32.totalorder %s87, %s90
    %p99 = scmp.eq.s32.totalorder %s14, 1
    %p100 = por %p98, %p99
    %p101 = scmp.ne.s32.totalorder %s90, %s91
    %p102 = scmp.eq.s32.totalorder %s14, 0
    %p103 = por %p101, %p102
    %p104 = scmp.ne.s32.totalorder %s90, %s91
    %p105 = scmp.eq.s32.totalorder %s15, 1
    %p106 = por %p104, %p105
    %p108 = scmp.ne.s32.totalorder %s91, %s107
    %p109 = scmp.eq.s32.totalorder %s15, 0
    %p110 = por %p108, %p109
    %p111 = scmp.le.s32.totalorder 1, %s9
    %p112 = scmp.lt.s32.totalorder %s9, 3
    %p113 = pnand %p111, %p112
    %p114 = pneg %p113
    // Predicated region
    $region9: #{net_forward.3} parent=5 // pred_check
      _
    $region10: #{net_forward.3} parent=5 // pred_check_branch
      %116 = sbr.rel (%p113) target = $region12
    $region11: #{net_forward.3} parent=5 // pred_region
      %s117 = ssub.s32 %s9, 1
      // Predicated region
      $region13: #{net_forward.3} parent=11 // pred_check
        %p118 = pneg %p56
      $region14: #{net_forward.3} parent=11 // pred_check_branch
        %120 = sbr.rel (%p118) target = $region16
      $region15: #{net_forward.3} parent=11 // pred_region
        _
      $region16: #{net_forward.3} parent=11 // pred_fallthru
        _
      // Predicated region
      $region17: #{net_forward.3} parent=11 // pred_check
        %p121 = pneg %p77
      $region18: #{net_forward.3} parent=11 // pred_check_branch
        %123 = sbr.rel (%p121) target = $region20
      $region19: #{net_forward.3} parent=11 // pred_region
        _
      $region20: #{net_forward.3} parent=11 // pred_fallthru
        _
    $region12: #{net_forward.3} parent=5 // pred_fallthru
      _
    %p124 = scmp.lt.s32.totalorder %s9, 2
    // Predicated region
    $region21: #{net_forward.3} parent=5 // pred_check
      %p125 = pneg %p124
    $region22: #{net_forward.3} parent=5 // pred_check_branch
      %127 = sbr.rel (%p125) target = $region24
    $region23: #{net_forward.3} parent=5 // pred_region
      // Predicated region
      $region25: #{net_forward.3} parent=23 // pred_check
        %p128 = pneg %p29
      $region26: #{net_forward.3} parent=23 // pred_check_branch
        %130 = sbr.rel (%p128) target = $region28
      $region27: #{net_forward.3} parent=23 // pred_region
        %s131 = smul.u32 98, %s9
        %p132 = scmp.lt.s32.totalorder %s131, 195
        %s133 = scalar_select %p132, %s131, 195
        %s134 = smul.addr %s133, 4
        %s135 = scalar_lea.vmem %s0, %s134
        %s136 = smul.u32 98, %s9
      $region28: #{net_forward.3} parent=23 // pred_fallthru
        _
    $region24: #{net_forward.3} parent=5 // pred_fallthru
      _
    %p137 = scmp.le.s32.totalorder 1, %s9
    %p138 = scmp.lt.s32.totalorder %s9, 3
    %p139 = pnand %p137, %p138
    %p140 = pneg %p139
    // Predicated region
    $region29: #{net_forward.3} parent=5 // pred_check
      _
    $region30: #{net_forward.3} parent=5 // pred_check_branch
      %142 = sbr.rel (%p139) target = $region32
    $region31: #{net_forward.3} parent=5 // pred_region
      %s143 = ssub.s32 %s9, 1
      %s144 = smul.u32 98, %s14
      %p145 = scmp.lt.s32.totalorder %s144, 195
      %s146 = scalar_select %p145, %s144, 195
      %s147 = smul.addr %s146, 4
      %s148 = scalar_lea.vmem %s0, %s147
      %p149 = pneg %p35
      %p150 = pneg %p32
      %p151 = pneg %p56
      %p152 = pneg %p53
      %p153 = pneg %p77
      %p154 = pneg %p74
      %p155 = pneg %p103
      %p156 = pneg %p100
      %s157 = smul.u32 98, %s14
      %p158 = scmp.lt.s32.totalorder %s157, 195
      %s159 = scalar_select %p158, %s157, 195
      %s160 = smul.addr %s159, 4
      %s161 = scalar_lea.vmem %s3, %s160
      %s162 = smul.u32 98, %s14
      %p163 = scmp.lt.s32.totalorder %s162, 195
      %s164 = scalar_select %p163, %s162, 195
      %s165 = smul.addr %s164, 4
      %s166 = scalar_lea.vmem %s0, %s165
      %s167 = smul.u32 98, %s14
      %s168 = smul.u32 98, %s14
      %p169 = scmp.lt.s32.totalorder %s168, 195
      %s170 = scalar_select %p169, %s168, 195
      %s171 = smul.addr %s170, 4
      %s172 = scalar_lea.vmem %s3, %s171
      %s173 = smul.u32 98, %s14
      %v175 = vld [vmem:[%s166] sm:$0xf]
      %v176 = vld [vmem:[%s166 + $0x4] sm:$0xf]
      %v177 = vld [vmem:[%s166 + $0x8] sm:$0xf]
      %v178 = vld [vmem:[%s166 + $0xc] sm:$0xf]
      %v179 = vld [vmem:[%s166 + $0x10] sm:$0xf]
      %v180 = vld [vmem:[%s166 + $0x14] sm:$0xf]
      %v181 = vld [vmem:[%s166 + $0x18] sm:$0xf]
      %v182 = vld [vmem:[%s166 + $0x1c] sm:$0xf]
      %v183 = vld [vmem:[%s166 + $0x20] sm:$0xf]
      %v184 = vld [vmem:[%s166 + $0x24] sm:$0xf]
      %v185 = vld [vmem:[%s166 + $0x28] sm:$0xf]
      %v186 = vld [vmem:[%s166 + $0x2c] sm:$0xf]
      %v187 = vld [vmem:[%s166 + $0x30] sm:$0xf]
      %v188 = vld [vmem:[%s166 + $0x34] sm:$0xf]
      %v189 = vld [vmem:[%s166 + $0x38] sm:$0xf]
      %v190 = vld [vmem:[%s166 + $0x3c] sm:$0xf]
      %v191 = vld [vmem:[%s166 + $0x40] sm:$0xf]
      %v192 = vld [vmem:[%s166 + $0x44] sm:$0xf]
      %v193 = vld [vmem:[%s166 + $0x48] sm:$0xf]
      %v194 = vld [vmem:[%s166 + $0x4c] sm:$0xf]
      %v195 = vld [vmem:[%s166 + $0x50] sm:$0xf]
      %v196 = vld [vmem:[%s166 + $0x54] sm:$0xf]
      %v197 = vld [vmem:[%s166 + $0x58] sm:$0xf]
      %v198 = vld [vmem:[%s166 + $0x5c] sm:$0xf]
      %v199 = vld [vmem:[%s166 + $0x60] sm:$0xf]
      %v200 = vld [vmem:[%s166 + $0x64] sm:$0xf]
      %v201 = vld [vmem:[%s166 + $0x68] sm:$0xf]
      %v202 = vld [vmem:[%s166 + $0x6c] sm:$0xf]
      %v203 = vld [vmem:[%s166 + $0x70] sm:$0xf]
      %v204 = vld [vmem:[%s166 + $0x74] sm:$0xf]
      %v205 = vld [vmem:[%s166 + $0x78] sm:$0xf]
      %v206 = vld [vmem:[%s166 + $0x7c] sm:$0xf]
      %v207 = vld [vmem:[%s166 + $0x80] sm:$0xf]
      %v208 = vld [vmem:[%s166 + $0x84] sm:$0xf]
      %v209 = vld [vmem:[%s166 + $0x88] sm:$0xf]
      %v210 = vld [vmem:[%s166 + $0x8c] sm:$0xf]
      %v211 = vld [vmem:[%s166 + $0x90] sm:$0xf]
      %v212 = vld [vmem:[%s166 + $0x94] sm:$0xf]
      %v213 = vld [vmem:[%s166 + $0x98] sm:$0xf]
      %v214 = vld [vmem:[%s166 + $0x9c] sm:$0xf]
      %v215 = vld [vmem:[%s166 + $0xa0] sm:$0xf]
      %v216 = vld [vmem:[%s166 + $0xa4] sm:$0xf]
      %v217 = vld [vmem:[%s166 + $0xa8] sm:$0xf]
      %v218 = vld [vmem:[%s166 + $0xac] sm:$0xf]
      %v219 = vld [vmem:[%s166 + $0xb0] sm:$0xf]
      %v220 = vld [vmem:[%s166 + $0xb4] sm:$0xf]
      %v221 = vld [vmem:[%s166 + $0xb8] sm:$0xf]
      %v222 = vld [vmem:[%s166 + $0xbc] sm:$0xf]
      %v223 = vld [vmem:[%s166 + $0xc0] sm:$0xf]
      %v224 = vld [vmem:[%s166 + $0xc4] sm:$0xf]
      %v225 = vld [vmem:[%s166 + $0xc8] sm:$0xf]
      %v226 = vld [vmem:[%s166 + $0xcc] sm:$0xf]
      %v227 = vld [vmem:[%s166 + $0xd0] sm:$0xf]
      %v228 = vld [vmem:[%s166 + $0xd4] sm:$0xf]
      %v229 = vld [vmem:[%s166 + $0xd8] sm:$0xf]
      %v230 = vld [vmem:[%s166 + $0xdc] sm:$0xf]
      %v231 = vld [vmem:[%s166 + $0xe0] sm:$0xf]
      %v232 = vld [vmem:[%s166 + $0xe4] sm:$0xf]
      %v233 = vld [vmem:[%s166 + $0xe8] sm:$0xf]
      %v234 = vld [vmem:[%s166 + $0xec] sm:$0xf]
      %v235 = vld [vmem:[%s166 + $0xf0] sm:$0xf]
      %v236 = vld [vmem:[%s166 + $0xf4] sm:$0xf]
      %v237 = vld [vmem:[%s166 + $0xf8] sm:$0xf]
      %v238 = vld [vmem:[%s166 + $0xfc] sm:$0xf]
      %v239 = vld [vmem:[%s166 + $0x100] sm:$0xf]
      %v240 = vld [vmem:[%s166 + $0x104] sm:$0xf]
      %v241 = vld [vmem:[%s166 + $0x108] sm:$0xf]
      %v242 = vld [vmem:[%s166 + $0x10c] sm:$0xf]
      %v243 = vld [vmem:[%s166 + $0x110] sm:$0xf]
      %v244 = vld [vmem:[%s166 + $0x114] sm:$0xf]
      %v245 = vld [vmem:[%s166 + $0x118] sm:$0xf]
      %v246 = vld [vmem:[%s166 + $0x11c] sm:$0xf]
      %v247 = vld [vmem:[%s166 + $0x120] sm:$0xf]
      %v248 = vld [vmem:[%s166 + $0x124] sm:$0xf]
      %v249 = vld [vmem:[%s166 + $0x128] sm:$0xf]
      %v250 = vld [vmem:[%s166 + $0x12c] sm:$0xf]
      %v251 = vld [vmem:[%s166 + $0x130] sm:$0xf]
      %v252 = vld [vmem:[%s166 + $0x134] sm:$0xf]
      %v253 = vld [vmem:[%s166 + $0x138] sm:$0xf]
      %v254 = vld [vmem:[%s166 + $0x13c] sm:$0xf]
      %v255 = vld [vmem:[%s166 + $0x140] sm:$0xf]
      %v256 = vld [vmem:[%s166 + $0x144] sm:$0xf]
      %v257 = vld [vmem:[%s166 + $0x148] sm:$0xf]
      %v258 = vld [vmem:[%s166 + $0x14c] sm:$0xf]
      %v259 = vld [vmem:[%s166 + $0x150] sm:$0xf]
      %v260 = vld [vmem:[%s166 + $0x154] sm:$0xf]
      %v261 = vld [vmem:[%s166 + $0x158] sm:$0xf]
      %v262 = vld [vmem:[%s166 + $0x15c] sm:$0xf]
      %v263 = vld [vmem:[%s166 + $0x160] sm:$0xf]
      %v264 = vld [vmem:[%s166 + $0x164] sm:$0xf]
      %v265 = vld [vmem:[%s166 + $0x168] sm:$0xf]
      %v266 = vld [vmem:[%s166 + $0x16c] sm:$0xf]
      %v267 = vld [vmem:[%s166 + $0x170] sm:$0xf]
      %v268 = vld [vmem:[%s166 + $0x174] sm:$0xf]
      %v269 = vld [vmem:[%s166 + $0x178] sm:$0xf]
      %v270 = vld [vmem:[%s166 + $0x17c] sm:$0xf]
      %v271 = vld [vmem:[%s166 + $0x180] sm:$0xf]
      %v272 = vld [vmem:[%s166 + $0x184] sm:$0xf]
      %v273 = vld [vmem:[%s1] sm:$0xf]
      %v274 = vld [vmem:[%s1 + $0x4] sm:$0xf]
      %v275 = vld [vmem:[%s1 + $0x8] sm:$0xf]
      %v276 = vld [vmem:[%s1 + $0xc] sm:$0xf]
      %v277 = vld [vmem:[%s1 + $0x10] sm:$0xf]
      %v278 = vld [vmem:[%s1 + $0x14] sm:$0xf]
      %v279 = vld [vmem:[%s1 + $0x18] sm:$0xf]
      %v280 = vld [vmem:[%s1 + $0x1c] sm:$0xf]
      %v281 = vld [vmem:[%s1 + $0x20] sm:$0xf]
      %v282 = vld [vmem:[%s1 + $0x24] sm:$0xf]
      %v283 = vld [vmem:[%s1 + $0x28] sm:$0xf]
      %v284 = vld [vmem:[%s1 + $0x2c] sm:$0xf]
      %v285 = vld [vmem:[%s1 + $0x30] sm:$0xf]
      %v286 = vld [vmem:[%s1 + $0x34] sm:$0xf]
      %v287 = vld [vmem:[%s1 + $0x38] sm:$0xf]
      %v288 = vld [vmem:[%s1 + $0x3c] sm:$0xf]
      %v289 = vld [vmem:[%s2] sm:$0x1]
      %v291 = vlaneseq
      %v292 = vshrl.u32 %v291, 7
      %v293 = vsub.s32 0, %v292
      %v294 = vrot.slane %v289, %v293
      %v394 = vunpack.c.l.b16 %v175
      %v395 = vunpack.c.l.b16 %v176
      %v396 = vunpack.c.l.b16 %v177
      %v397 = vunpack.c.l.b16 %v178
      %v398 = vunpack.c.l.b16 %v179
      %v399 = vunpack.c.l.b16 %v180
      %v400 = vunpack.c.l.b16 %v181
      %v401 = vunpack.c.l.b16 %v182
      %v402 = vunpack.c.l.b16 %v183
      %v403 = vunpack.c.l.b16 %v184
      %v404 = vunpack.c.l.b16 %v185
      %v405 = vunpack.c.l.b16 %v186
      %v406 = vunpack.c.l.b16 %v187
      %v407 = vunpack.c.l.b16 %v188
      %v408 = vunpack.c.l.b16 %v189
      %v409 = vunpack.c.l.b16 %v190
      %v410 = vunpack.c.l.b16 %v191
      %v411 = vunpack.c.l.b16 %v192
      %v412 = vunpack.c.l.b16 %v193
      %v413 = vunpack.c.l.b16 %v194
      %v414 = vunpack.c.l.b16 %v195
      %v415 = vunpack.c.l.b16 %v196
      %v416 = vunpack.c.l.b16 %v197
      %v417 = vunpack.c.l.b16 %v198
      %v418 = vunpack.c.l.b16 %v199
      %v419 = vunpack.c.l.b16 %v200
      %v420 = vunpack.c.l.b16 %v201
      %v421 = vunpack.c.l.b16 %v202
      %v422 = vunpack.c.l.b16 %v203
      %v423 = vunpack.c.l.b16 %v204
      %v424 = vunpack.c.l.b16 %v205
      %v425 = vunpack.c.l.b16 %v206
      %v426 = vunpack.c.l.b16 %v207
      %v427 = vunpack.c.l.b16 %v208
      %v428 = vunpack.c.l.b16 %v209
      %v429 = vunpack.c.l.b16 %v210
      %v430 = vunpack.c.l.b16 %v211
      %v431 = vunpack.c.l.b16 %v212
      %v432 = vunpack.c.l.b16 %v213
      %v433 = vunpack.c.l.b16 %v214
      %v434 = vunpack.c.l.b16 %v215
      %v435 = vunpack.c.l.b16 %v216
      %v436 = vunpack.c.l.b16 %v217
      %v437 = vunpack.c.l.b16 %v218
      %v438 = vunpack.c.l.b16 %v219
      %v439 = vunpack.c.l.b16 %v220
      %v440 = vunpack.c.l.b16 %v221
      %v441 = vunpack.c.l.b16 %v222
      %v442 = vunpack.c.l.b16 %v223
      %v443 = vunpack.c.l.b16 %v224
      %v444 = vunpack.c.l.b16 %v225
      %v445 = vunpack.c.l.b16 %v226
      %v446 = vunpack.c.l.b16 %v227
      %v447 = vunpack.c.l.b16 %v228
      %v448 = vunpack.c.l.b16 %v229
      %v449 = vunpack.c.l.b16 %v230
      %v450 = vunpack.c.l.b16 %v231
      %v451 = vunpack.c.l.b16 %v232
      %v452 = vunpack.c.l.b16 %v233
      %v453 = vunpack.c.l.b16 %v234
      %v454 = vunpack.c.l.b16 %v235
      %v455 = vunpack.c.l.b16 %v236
      %v456 = vunpack.c.l.b16 %v237
      %v457 = vunpack.c.l.b16 %v238
      %v458 = vunpack.c.l.b16 %v239
      %v459 = vunpack.c.l.b16 %v240
      %v460 = vunpack.c.l.b16 %v241
      %v461 = vunpack.c.l.b16 %v242
      %v462 = vunpack.c.l.b16 %v243
      %v463 = vunpack.c.l.b16 %v244
      %v464 = vunpack.c.l.b16 %v245
      %v465 = vunpack.c.l.b16 %v246
      %v466 = vunpack.c.l.b16 %v247
      %v467 = vunpack.c.l.b16 %v248
      %v468 = vunpack.c.l.b16 %v249
      %v469 = vunpack.c.l.b16 %v250
      %v470 = vunpack.c.l.b16 %v251
      %v471 = vunpack.c.l.b16 %v252
      %v472 = vunpack.c.l.b16 %v253
      %v473 = vunpack.c.l.b16 %v254
      %v474 = vunpack.c.l.b16 %v255
      %v475 = vunpack.c.l.b16 %v256
      %v476 = vunpack.c.l.b16 %v257
      %v477 = vunpack.c.l.b16 %v258
      %v478 = vunpack.c.l.b16 %v259
      %v479 = vunpack.c.l.b16 %v260
      %v480 = vunpack.c.l.b16 %v261
      %v481 = vunpack.c.l.b16 %v262
      %v482 = vunpack.c.l.b16 %v263
      %v483 = vunpack.c.l.b16 %v264
      %v484 = vunpack.c.l.b16 %v265
      %v485 = vunpack.c.l.b16 %v266
      %v486 = vunpack.c.l.b16 %v267
      %v487 = vunpack.c.l.b16 %v268
      %v488 = vunpack.c.l.b16 %v269
      %v489 = vunpack.c.l.b16 %v270
      %v490 = vunpack.c.l.b16 %v271
      %v491 = vunpack.c.l.b16 %v272
      %v492 = vpack.c.b16 %v395, %v394
      %v493 = vpack.c.b16 %v397, %v396
      %v494 = vpack.c.b16 %v399, %v398
      %v495 = vpack.c.b16 %v401, %v400
      %v496 = vpack.c.b16 %v403, %v402
      %v497 = vpack.c.b16 %v405, %v404
      %v498 = vpack.c.b16 %v407, %v406
      %v499 = vpack.c.b16 %v409, %v408
      %v500 = vpack.c.b16 %v411, %v410
      %v501 = vpack.c.b16 %v413, %v412
      %v502 = vpack.c.b16 %v415, %v414
      %v503 = vpack.c.b16 %v417, %v416
      %v504 = vpack.c.b16 %v419, %v418
      %v505 = vpack.c.b16 %v421, %v420
      %v506 = vpack.c.b16 %v423, %v422
      %v507 = vpack.c.b16 %v425, %v424
      %v508 = vpack.c.b16 %v427, %v426
      %v509 = vpack.c.b16 %v429, %v428
      %v510 = vpack.c.b16 %v431, %v430
      %v511 = vpack.c.b16 %v433, %v432
      %v512 = vpack.c.b16 %v435, %v434
      %v513 = vpack.c.b16 %v437, %v436
      %v514 = vpack.c.b16 %v439, %v438
      %v515 = vpack.c.b16 %v441, %v440
      %v516 = vpack.c.b16 %v443, %v442
      %v517 = vpack.c.b16 %v445, %v444
      %v518 = vpack.c.b16 %v447, %v446
      %v519 = vpack.c.b16 %v449, %v448
      %v520 = vpack.c.b16 %v451, %v450
      %v521 = vpack.c.b16 %v453, %v452
      %v522 = vpack.c.b16 %v455, %v454
      %v523 = vpack.c.b16 %v457, %v456
      %v524 = vpack.c.b16 %v459, %v458
      %v525 = vpack.c.b16 %v461, %v460
      %v526 = vpack.c.b16 %v463, %v462
      %v527 = vpack.c.b16 %v465, %v464
      %v528 = vpack.c.b16 %v467, %v466
      %v529 = vpack.c.b16 %v469, %v468
      %v530 = vpack.c.b16 %v471, %v470
      %v531 = vpack.c.b16 %v473, %v472
      %v532 = vpack.c.b16 %v475, %v474
      %v533 = vpack.c.b16 %v477, %v476
      %v534 = vpack.c.b16 %v479, %v478
      %v535 = vpack.c.b16 %v481, %v480
      %v536 = vpack.c.b16 %v483, %v482
      %v537 = vpack.c.b16 %v485, %v484
      %v538 = vpack.c.b16 %v487, %v486
      %v539 = vpack.c.b16 %v489, %v488
      %v540 = vpack.c.b16 %v491, %v490
      %v606 = vunpack.c.l.b16 %v273
      %v607 = vunpack.c.l.b16 %v274
      %v608 = vunpack.c.l.b16 %v275
      %v609 = vunpack.c.l.b16 %v276
      %v610 = vunpack.c.l.b16 %v277
      %v611 = vunpack.c.l.b16 %v278
      %v612 = vunpack.c.l.b16 %v279
      %v613 = vunpack.c.l.b16 %v280
      %v614 = vunpack.c.l.b16 %v281
      %v615 = vunpack.c.l.b16 %v282
      %v616 = vunpack.c.l.b16 %v283
      %v617 = vunpack.c.l.b16 %v284
      %v618 = vunpack.c.l.b16 %v285
      %v619 = vunpack.c.l.b16 %v286
      %v620 = vunpack.c.l.b16 %v287
      %v621 = vunpack.c.l.b16 %v288
      %v622 = vpack.c.b16 %v607, %v606
      %v623 = vpack.c.b16 %v609, %v608
      %v624 = vpack.c.b16 %v611, %v610
      %v625 = vpack.c.b16 %v613, %v612
      %v626 = vpack.c.b16 %v615, %v614
      %v627 = vpack.c.b16 %v617, %v616
      %v628 = vpack.c.b16 %v619, %v618
      %v629 = vpack.c.b16 %v621, %v620
      %638 = vmatprep.subr.bf16.mxu0 0
      %639 = vmatpush1.bf16.msra.mxu0 %v622
      %640 = vmatprep.subr.bf16.mxu0 0
      %641 = vmatpush1.bf16.msra.mxu0 %v623
      %642 = vmatprep.subr.bf16.mxu0 0
      %643 = vmatpush1.bf16.msra.mxu0 %v624
      %644 = vmatprep.subr.bf16.mxu0 0
      %645 = vmatpush1.bf16.msra.mxu0 %v625
      %646 = vmatprep.subr.bf16.mxu0 0
      %647 = vmatpush1.bf16.msra.mxu0 %v626
      %648 = vmatprep.subr.bf16.mxu0 0
      %649 = vmatpush1.bf16.msra.mxu0 %v627
      %650 = vmatprep.subr.bf16.mxu0 0
      %651 = vmatpush1.bf16.msra.mxu0 %v628
      %652 = vmatprep.subr.bf16.mxu0 0
      %653 = vmatpush1.bf16.msra.mxu0 %v629
      %654 = vmatprep.subr.bf16.mxu0 0
      %655 = vmatpush1.bf16.msra.mxu0 0
      %656 = vmatprep.subr.bf16.mxu0 0
      %657 = vmatpush1.bf16.msra.mxu0 0
      %658 = vmatprep.subr.bf16.mxu0 0
      %659 = vmatpush1.bf16.msra.mxu0 0
      %660 = vmatprep.subr.bf16.mxu0 0
      %661 = vmatpush1.bf16.msra.mxu0 0
      %662 = vmatprep.subr.bf16.mxu0 0
      %663 = vmatpush1.bf16.msra.mxu0 0
      %664 = vmatprep.subr.bf16.mxu0 0
      %665 = vmatpush1.bf16.msra.mxu0 0
      %666 = vmatprep.subr.bf16.mxu0 0
      %667 = vmatpush1.bf16.msra.mxu0 0
      %668 = vmatprep.subr.bf16.mxu0 0
      %669 = vmatpush1.bf16.msra.mxu0 0
      %670 = vmatprep.mubr.bf16.mxu0 0
      %671 = vmatmul.mubr.bf16.gmra.mrb[0].mxu0 %v492
      %v672 = vpop.f32.mrb[0].mxu0
      %v673 = vadd.f32 %v294, %v672
      %v674 = vpop.f32.mrb[0].mxu0
      %v675 = vpop.f32.mrb[0].mxu0
      %v676 = vadd.f32 %v294, %v675
      %v677 = vpop.f32.mrb[0].mxu0
      %678 = vmatprep.mubr.bf16.mxu0 0
      %679 = vmatmul.mubr.bf16.gmra.mrb[0].mxu0 %v493
      %v680 = vpop.f32.mrb[0].mxu0
      %v681 = vadd.f32 %v294, %v680
      %v682 = vpop.f32.mrb[0].mxu0
      %v683 = vpop.f32.mrb[0].mxu0
      %v684 = vadd.f32 %v294, %v683
      %v685 = vpop.f32.mrb[0].mxu0
      %686 = vmatprep.mubr.bf16.mxu0 0
      %687 = vmatmul.mubr.bf16.gmra.mrb[0].mxu0 %v494
      %v688 = vpop.f32.mrb[0].mxu0
      %v689 = vadd.f32 %v294, %v688
      %v690 = vpop.f32.mrb[0].mxu0
      %v691 = vpop.f32.mrb[0].mxu0
      %v692 = vadd.f32 %v294, %v691
      %v693 = vpop.f32.mrb[0].mxu0
      %694 = vmatprep.mubr.bf16.mxu0 0
      %695 = vmatmul.mubr.bf16.gmra.mrb[0].mxu0 %v495
      %v696 = vpop.f32.mrb[0].mxu0
      %v697 = vadd.f32 %v294, %v696
      %v698 = vpop.f32.mrb[0].mxu0
      %v699 = vpop.f32.mrb[0].mxu0
      %v700 = vadd.f32 %v294, %v699
      %v701 = vpop.f32.mrb[0].mxu0
      %702 = vmatprep.mubr.bf16.mxu0 0
      %703 = vmatmul.mubr.bf16.gmra.mrb[0].mxu0 %v496
      %v704 = vpop.f32.mrb[0].mxu0
      %v705 = vadd.f32 %v294, %v704
      %v706 = vpop.f32.mrb[0].mxu0
      %v707 = vpop.f32.mrb[0].mxu0
      %v708 = vadd.f32 %v294, %v707
      %v709 = vpop.f32.mrb[0].mxu0
      %710 = vmatprep.mubr.bf16.mxu0 0
      %711 = vmatmul.mubr.bf16.gmra.mrb[0].mxu0 %v497
      %v712 = vpop.f32.mrb[0].mxu0
      %v713 = vadd.f32 %v294, %v712
      %v714 = vpop.f32.mrb[0].mxu0
      %v715 = vpop.f32.mrb[0].mxu0
      %v716 = vadd.f32 %v294, %v715
      %v717 = vpop.f32.mrb[0].mxu0
      %718 = vmatprep.mubr.bf16.mxu0 0
      %719 = vmatmul.mubr.bf16.gmra.mrb[0].mxu0 %v498
      %v720 = vpop.f32.mrb[0].mxu0
      %v721 = vadd.f32 %v294, %v720
      %v722 = vpop.f32.mrb[0].mxu0
      %v723 = vpop.f32.mrb[0].mxu0
      %v724 = vadd.f32 %v294, %v723
      %v725 = vpop.f32.mrb[0].mxu0
      %726 = vmatprep.mubr.bf16.mxu0 0
      %727 = vmatmul.mubr.bf16.gmra.mrb[0].mxu0 %v499
      %v728 = vpop.f32.mrb[0].mxu0
      %v729 = vadd.f32 %v294, %v728
      %v730 = vpop.f32.mrb[0].mxu0
      %v731 = vpop.f32.mrb[0].mxu0
      %v732 = vadd.f32 %v294, %v731
      %v733 = vpop.f32.mrb[0].mxu0
      %734 = vmatprep.mubr.bf16.mxu0 0
      %735 = vmatmul.mubr.bf16.gmra.mrb[0].mxu0 %v500
      %v736 = vpop.f32.mrb[0].mxu0
      %v737 = vadd.f32 %v294, %v736
      %v738 = vpop.f32.mrb[0].mxu0
      %v739 = vpop.f32.mrb[0].mxu0
      %v740 = vadd.f32 %v294, %v739
      %v741 = vpop.f32.mrb[0].mxu0
      %742 = vmatprep.mubr.bf16.mxu0 0
      %743 = vmatmul.mubr.bf16.gmra.mrb[0].mxu0 %v501
      %v744 = vpop.f32.mrb[0].mxu0
      %v745 = vadd.f32 %v294, %v744
      %v746 = vpop.f32.mrb[0].mxu0
      %v747 = vpop.f32.mrb[0].mxu0
      %v748 = vadd.f32 %v294, %v747
      %v749 = vpop.f32.mrb[0].mxu0
      %750 = vmatprep.mubr.bf16.mxu0 0
      %751 = vmatmul.mubr.bf16.gmra.mrb[0].mxu0 %v502
      %v752 = vpop.f32.mrb[0].mxu0
      %v753 = vadd.f32 %v294, %v752
      %v754 = vpop.f32.mrb[0].mxu0
      %v755 = vpop.f32.mrb[0].mxu0
      %v756 = vadd.f32 %v294, %v755
      %v757 = vpop.f32.mrb[0].mxu0
      %758 = vmatprep.mubr.bf16.mxu0 0
      %759 = vmatmul.mubr.bf16.gmra.mrb[0].mxu0 %v503
      %v760 = vpop.f32.mrb[0].mxu0
      %v761 = vadd.f32 %v294, %v760
      %v762 = vpop.f32.mrb[0].mxu0
      %v763 = vpop.f32.mrb[0].mxu0
      %v764 = vadd.f32 %v294, %v763
      %v765 = vpop.f32.mrb[0].mxu0
      %766 = vmatprep.mubr.bf16.mxu0 0
      %767 = vmatmul.mubr.bf16.gmra.mrb[0].mxu0 %v504
      %v768 = vpop.f32.mrb[0].mxu0
      %v769 = vadd.f32 %v294, %v768
      %v770 = vpop.f32.mrb[0].mxu0
      %v771 = vpop.f32.mrb[0].mxu0
      %v772 = vadd.f32 %v294, %v771
      %v773 = vpop.f32.mrb[0].mxu0
      %774 = vmatprep.mubr.bf16.mxu0 0
      %775 = vmatmul.mubr.bf16.gmra.mrb[0].mxu0 %v505
      %v776 = vpop.f32.mrb[0].mxu0
      %v777 = vadd.f32 %v294, %v776
      %v778 = vpop.f32.mrb[0].mxu0
      %v779 = vpop.f32.mrb[0].mxu0
      %v780 = vadd.f32 %v294, %v779
      %v781 = vpop.f32.mrb[0].mxu0
      %782 = vmatprep.mubr.bf16.mxu0 0
      %783 = vmatmul.mubr.bf16.gmra.mrb[0].mxu0 %v506
      %v784 = vpop.f32.mrb[0].mxu0
      %v785 = vadd.f32 %v294, %v784
      %v786 = vpop.f32.mrb[0].mxu0
      %v787 = vpop.f32.mrb[0].mxu0
      %v788 = vadd.f32 %v294, %v787
      %v789 = vpop.f32.mrb[0].mxu0
      %790 = vmatprep.mubr.bf16.mxu0 0
      %791 = vmatmul.mubr.bf16.gmra.mrb[0].mxu0 %v507
      %v792 = vpop.f32.mrb[0].mxu0
      %v793 = vadd.f32 %v294, %v792
      %v794 = vpop.f32.mrb[0].mxu0
      %v795 = vpop.f32.mrb[0].mxu0
      %v796 = vadd.f32 %v294, %v795
      %v797 = vpop.f32.mrb[0].mxu0
      %798 = vmatprep.mubr.bf16.mxu0 0
      %799 = vmatmul.mubr.bf16.gmra.mrb[0].mxu0 %v508
      %v800 = vpop.f32.mrb[0].mxu0
      %v801 = vadd.f32 %v294, %v800
      %v802 = vpop.f32.mrb[0].mxu0
      %v803 = vpop.f32.mrb[0].mxu0
      %v804 = vadd.f32 %v294, %v803
      %v805 = vpop.f32.mrb[0].mxu0
      %806 = vmatprep.mubr.bf16.mxu0 0
      %807 = vmatmul.mubr.bf16.gmra.mrb[0].mxu0 %v509
      %v808 = vpop.f32.mrb[0].mxu0
      %v809 = vadd.f32 %v294, %v808
      %v810 = vpop.f32.mrb[0].mxu0
      %v811 = vpop.f32.mrb[0].mxu0
      %v812 = vadd.f32 %v294, %v811
      %v813 = vpop.f32.mrb[0].mxu0
      %814 = vmatprep.mubr.bf16.mxu0 0
      %815 = vmatmul.mubr.bf16.gmra.mrb[0].mxu0 %v510
      %v816 = vpop.f32.mrb[0].mxu0
      %v817 = vadd.f32 %v294, %v816
      %v818 = vpop.f32.mrb[0].mxu0
      %v819 = vpop.f32.mrb[0].mxu0
      %v820 = vadd.f32 %v294, %v819
      %v821 = vpop.f32.mrb[0].mxu0
      %822 = vmatprep.mubr.bf16.mxu0 0
      %823 = vmatmul.mubr.bf16.gmra.mrb[0].mxu0 %v511
      %v824 = vpop.f32.mrb[0].mxu0
      %v825 = vadd.f32 %v294, %v824
      %v826 = vpop.f32.mrb[0].mxu0
      %v827 = vpop.f32.mrb[0].mxu0
      %v828 = vadd.f32 %v294, %v827
      %v829 = vpop.f32.mrb[0].mxu0
      %830 = vmatprep.mubr.bf16.mxu0 0
      %831 = vmatmul.mubr.bf16.gmra.mrb[0].mxu0 %v512
      %v832 = vpop.f32.mrb[0].mxu0
      %v833 = vadd.f32 %v294, %v832
      %v834 = vpop.f32.mrb[0].mxu0
      %v835 = vpop.f32.mrb[0].mxu0
      %v836 = vadd.f32 %v294, %v835
      %v837 = vpop.f32.mrb[0].mxu0
      %838 = vmatprep.mubr.bf16.mxu0 0
      %839 = vmatmul.mubr.bf16.gmra.mrb[0].mxu0 %v513
      %v840 = vpop.f32.mrb[0].mxu0
      %v841 = vadd.f32 %v294, %v840
      %v842 = vpop.f32.mrb[0].mxu0
      %v843 = vpop.f32.mrb[0].mxu0
      %v844 = vadd.f32 %v294, %v843
      %v845 = vpop.f32.mrb[0].mxu0
      %846 = vmatprep.mubr.bf16.mxu0 0
      %847 = vmatmul.mubr.bf16.gmra.mrb[0].mxu0 %v514
      %v848 = vpop.f32.mrb[0].mxu0
      %v849 = vadd.f32 %v294, %v848
      %v850 = vpop.f32.mrb[0].mxu0
      %v851 = vpop.f32.mrb[0].mxu0
      %v852 = vadd.f32 %v294, %v851
      %v853 = vpop.f32.mrb[0].mxu0
      %854 = vmatprep.mubr.bf16.mxu0 0
      %855 = vmatmul.mubr.bf16.gmra.mrb[0].mxu0 %v515
      %v856 = vpop.f32.mrb[0].mxu0
      %v857 = vadd.f32 %v294, %v856
      %v858 = vpop.f32.mrb[0].mxu0
      %v859 = vpop.f32.mrb[0].mxu0
      %v860 = vadd.f32 %v294, %v859
      %v861 = vpop.f32.mrb[0].mxu0
      %862 = vmatprep.mubr.bf16.mxu0 0
      %863 = vmatmul.mubr.bf16.gmra.mrb[0].mxu0 %v516
      %v864 = vpop.f32.mrb[0].mxu0
      %v865 = vadd.f32 %v294, %v864
      %v866 = vpop.f32.mrb[0].mxu0
      %v867 = vpop.f32.mrb[0].mxu0
      %v868 = vadd.f32 %v294, %v867
      %v869 = vpop.f32.mrb[0].mxu0
      %870 = vmatprep.mubr.bf16.mxu0 0
      %871 = vmatmul.mubr.bf16.gmra.mrb[0].mxu0 %v517
      %v872 = vpop.f32.mrb[0].mxu0
      %v873 = vadd.f32 %v294, %v872
      %v874 = vpop.f32.mrb[0].mxu0
      %v875 = vpop.f32.mrb[0].mxu0
      %v876 = vadd.f32 %v294, %v875
      %v877 = vpop.f32.mrb[0].mxu0
      %878 = vmatprep.mubr.bf16.mxu0 0
      %879 = vmatmul.mubr.bf16.gmra.mrb[0].mxu0 %v518
      %v880 = vpop.f32.mrb[0].mxu0
      %v881 = vadd.f32 %v294, %v880
      %v882 = vpop.f32.mrb[0].mxu0
      %v883 = vpop.f32.mrb[0].mxu0
      %v884 = vadd.f32 %v294, %v883
      %v885 = vpop.f32.mrb[0].mxu0
      %886 = vmatprep.mubr.bf16.mxu0 0
      %887 = vmatmul.mubr.bf16.gmra.mrb[0].mxu0 %v519
      %v888 = vpop.f32.mrb[0].mxu0
      %v889 = vadd.f32 %v294, %v888
      %v890 = vpop.f32.mrb[0].mxu0
      %v891 = vpop.f32.mrb[0].mxu0
      %v892 = vadd.f32 %v294, %v891
      %v893 = vpop.f32.mrb[0].mxu0
      %894 = vmatprep.mubr.bf16.mxu0 0
      %895 = vmatmul.mubr.bf16.gmra.mrb[0].mxu0 %v520
      %v896 = vpop.f32.mrb[0].mxu0
      %v897 = vadd.f32 %v294, %v896
      %v898 = vpop.f32.mrb[0].mxu0
      %v899 = vpop.f32.mrb[0].mxu0
      %v900 = vadd.f32 %v294, %v899
      %v901 = vpop.f32.mrb[0].mxu0
      %902 = vmatprep.mubr.bf16.mxu0 0
      %903 = vmatmul.mubr.bf16.gmra.mrb[0].mxu0 %v521
      %v904 = vpop.f32.mrb[0].mxu0
      %v905 = vadd.f32 %v294, %v904
      %v906 = vpop.f32.mrb[0].mxu0
      %v907 = vpop.f32.mrb[0].mxu0
      %v908 = vadd.f32 %v294, %v907
      %v909 = vpop.f32.mrb[0].mxu0
      %910 = vmatprep.mubr.bf16.mxu0 0
      %911 = vmatmul.mubr.bf16.gmra.mrb[0].mxu0 %v522
      %v912 = vpop.f32.mrb[0].mxu0
      %v913 = vadd.f32 %v294, %v912
      %v914 = vpop.f32.mrb[0].mxu0
      %v915 = vpop.f32.mrb[0].mxu0
      %v916 = vadd.f32 %v294, %v915
      %v917 = vpop.f32.mrb[0].mxu0
      %918 = vmatprep.mubr.bf16.mxu0 0
      %919 = vmatmul.mubr.bf16.gmra.mrb[0].mxu0 %v523
      %v920 = vpop.f32.mrb[0].mxu0
      %v921 = vadd.f32 %v294, %v920
      %v922 = vpop.f32.mrb[0].mxu0
      %v923 = vpop.f32.mrb[0].mxu0
      %v924 = vadd.f32 %v294, %v923
      %v925 = vpop.f32.mrb[0].mxu0
      %926 = vmatprep.mubr.bf16.mxu0 0
      %927 = vmatmul.mubr.bf16.gmra.mrb[0].mxu0 %v524
      %v928 = vpop.f32.mrb[0].mxu0
      %v929 = vadd.f32 %v294, %v928
      %v930 = vpop.f32.mrb[0].mxu0
      %v931 = vpop.f32.mrb[0].mxu0
      %v932 = vadd.f32 %v294, %v931
      %v933 = vpop.f32.mrb[0].mxu0
      %934 = vmatprep.mubr.bf16.mxu0 0
      %935 = vmatmul.mubr.bf16.gmra.mrb[0].mxu0 %v525
      %v936 = vpop.f32.mrb[0].mxu0
      %v937 = vadd.f32 %v294, %v936
      %v938 = vpop.f32.mrb[0].mxu0
      %v939 = vpop.f32.mrb[0].mxu0
      %v940 = vadd.f32 %v294, %v939
      %v941 = vpop.f32.mrb[0].mxu0
      %942 = vmatprep.mubr.bf16.mxu0 0
      %943 = vmatmul.mubr.bf16.gmra.mrb[0].mxu0 %v526
      %v944 = vpop.f32.mrb[0].mxu0
      %v945 = vadd.f32 %v294, %v944
      %v946 = vpop.f32.mrb[0].mxu0
      %v947 = vpop.f32.mrb[0].mxu0
      %v948 = vadd.f32 %v294, %v947
      %v949 = vpop.f32.mrb[0].mxu0
      %950 = vmatprep.mubr.bf16.mxu0 0
      %951 = vmatmul.mubr.bf16.gmra.mrb[0].mxu0 %v527
      %v952 = vpop.f32.mrb[0].mxu0
      %v953 = vadd.f32 %v294, %v952
      %v954 = vpop.f32.mrb[0].mxu0
      %v955 = vpop.f32.mrb[0].mxu0
      %v956 = vadd.f32 %v294, %v955
      %v957 = vpop.f32.mrb[0].mxu0
      %958 = vmatprep.mubr.bf16.mxu0 0
      %959 = vmatmul.mubr.bf16.gmra.mrb[0].mxu0 %v528
      %v960 = vpop.f32.mrb[0].mxu0
      %v961 = vadd.f32 %v294, %v960
      %v962 = vpop.f32.mrb[0].mxu0
      %v963 = vpop.f32.mrb[0].mxu0
      %v964 = vadd.f32 %v294, %v963
      %v965 = vpop.f32.mrb[0].mxu0
      %966 = vmatprep.mubr.bf16.mxu0 0
      %967 = vmatmul.mubr.bf16.gmra.mrb[0].mxu0 %v529
      %v968 = vpop.f32.mrb[0].mxu0
      %v969 = vadd.f32 %v294, %v968
      %v970 = vpop.f32.mrb[0].mxu0
      %v971 = vpop.f32.mrb[0].mxu0
      %v972 = vadd.f32 %v294, %v971
      %v973 = vpop.f32.mrb[0].mxu0
      %974 = vmatprep.mubr.bf16.mxu0 0
      %975 = vmatmul.mubr.bf16.gmra.mrb[0].mxu0 %v530
      %v976 = vpop.f32.mrb[0].mxu0
      %v977 = vadd.f32 %v294, %v976
      %v978 = vpop.f32.mrb[0].mxu0
      %v979 = vpop.f32.mrb[0].mxu0
      %v980 = vadd.f32 %v294, %v979
      %v981 = vpop.f32.mrb[0].mxu0
      %982 = vmatprep.mubr.bf16.mxu0 0
      %983 = vmatmul.mubr.bf16.gmra.mrb[0].mxu0 %v531
      %v984 = vpop.f32.mrb[0].mxu0
      %v985 = vadd.f32 %v294, %v984
      %v986 = vpop.f32.mrb[0].mxu0
      %v987 = vpop.f32.mrb[0].mxu0
      %v988 = vadd.f32 %v294, %v987
      %v989 = vpop.f32.mrb[0].mxu0
      %990 = vmatprep.mubr.bf16.mxu0 0
      %991 = vmatmul.mubr.bf16.gmra.mrb[0].mxu0 %v532
      %v992 = vpop.f32.mrb[0].mxu0
      %v993 = vadd.f32 %v294, %v992
      %v994 = vpop.f32.mrb[0].mxu0
      %v995 = vpop.f32.mrb[0].mxu0
      %v996 = vadd.f32 %v294, %v995
      %v997 = vpop.f32.mrb[0].mxu0
      %998 = vmatprep.mubr.bf16.mxu0 0
      %999 = vmatmul.mubr.bf16.gmra.mrb[0].mxu0 %v533
      %v1000 = vpop.f32.mrb[0].mxu0
      %v1001 = vadd.f32 %v294, %v1000
      %v1002 = vpop.f32.mrb[0].mxu0
      %v1003 = vpop.f32.mrb[0].mxu0
      %v1004 = vadd.f32 %v294, %v1003
      %v1005 = vpop.f32.mrb[0].mxu0
      %1006 = vmatprep.mubr.bf16.mxu0 0
      %1007 = vmatmul.mubr.bf16.gmra.mrb[0].mxu0 %v534
      %v1008 = vpop.f32.mrb[0].mxu0
      %v1009 = vadd.f32 %v294, %v1008
      %v1010 = vpop.f32.mrb[0].mxu0
      %v1011 = vpop.f32.mrb[0].mxu0
      %v1012 = vadd.f32 %v294, %v1011
      %v1013 = vpop.f32.mrb[0].mxu0
      %1014 = vmatprep.mubr.bf16.mxu0 0
      %1015 = vmatmul.mubr.bf16.gmra.mrb[0].mxu0 %v535
      %v1016 = vpop.f32.mrb[0].mxu0
      %v1017 = vadd.f32 %v294, %v1016
      %v1018 = vpop.f32.mrb[0].mxu0
      %v1019 = vpop.f32.mrb[0].mxu0
      %v1020 = vadd.f32 %v294, %v1019
      %v1021 = vpop.f32.mrb[0].mxu0
      %1022 = vmatprep.mubr.bf16.mxu0 0
      %1023 = vmatmul.mubr.bf16.gmra.mrb[0].mxu0 %v536
      %v1024 = vpop.f32.mrb[0].mxu0
      %v1025 = vadd.f32 %v294, %v1024
      %v1026 = vpop.f32.mrb[0].mxu0
      %v1027 = vpop.f32.mrb[0].mxu0
      %v1028 = vadd.f32 %v294, %v1027
      %v1029 = vpop.f32.mrb[0].mxu0
      %1030 = vmatprep.mubr.bf16.mxu0 0
      %1031 = vmatmul.mubr.bf16.gmra.mrb[0].mxu0 %v537
      %v1032 = vpop.f32.mrb[0].mxu0
      %v1033 = vadd.f32 %v294, %v1032
      %v1034 = vpop.f32.mrb[0].mxu0
      %v1035 = vpop.f32.mrb[0].mxu0
      %v1036 = vadd.f32 %v294, %v1035
      %v1037 = vpop.f32.mrb[0].mxu0
      %1038 = vmatprep.mubr.bf16.mxu0 0
      %1039 = vmatmul.mubr.bf16.gmra.mrb[0].mxu0 %v538
      %v1040 = vpop.f32.mrb[0].mxu0
      %v1041 = vadd.f32 %v294, %v1040
      %v1042 = vpop.f32.mrb[0].mxu0
      %v1043 = vpop.f32.mrb[0].mxu0
      %v1044 = vadd.f32 %v294, %v1043
      %v1045 = vpop.f32.mrb[0].mxu0
      %1046 = vmatprep.mubr.bf16.mxu0 0
      %1047 = vmatmul.mubr.bf16.gmra.mrb[0].mxu0 %v539
      %v1048 = vpop.f32.mrb[0].mxu0
      %v1049 = vadd.f32 %v294, %v1048
      %v1050 = vpop.f32.mrb[0].mxu0
      %v1051 = vpop.f32.mrb[0].mxu0
      %v1052 = vadd.f32 %v294, %v1051
      %v1053 = vpop.f32.mrb[0].mxu0
      %1054 = vmatprep.mubr.bf16.mxu0 0
      %1055 = vmatmul.mubr.bf16.gmra.mrb[0].mxu0 %v540
      %v1056 = vpop.f32.mrb[0].mxu0
      %v1057 = vadd.f32 %v294, %v1056
      %v1058 = vpop.f32.mrb[0].mxu0
      %v1059 = vpop.f32.mrb[0].mxu0
      %v1060 = vadd.f32 %v294, %v1059
      %v1061 = vpop.f32.mrb[0].mxu0
      %1062 = vdwg.mxu0
      %v1063 = vmax.f32 %v673, 0.0
      %v1064 = vmax.f32 %v676, 0.0
      %v1065 = vmax.f32 %v681, 0.0
      %v1066 = vmax.f32 %v684, 0.0
      %v1067 = vmax.f32 %v689, 0.0
      %v1068 = vmax.f32 %v692, 0.0
      %v1069 = vmax.f32 %v697, 0.0
      %v1070 = vmax.f32 %v700, 0.0
      %v1071 = vmax.f32 %v705, 0.0
      %v1072 = vmax.f32 %v708, 0.0
      %v1073 = vmax.f32 %v713, 0.0
      %v1074 = vmax.f32 %v716, 0.0
      %v1075 = vmax.f32 %v721, 0.0
      %v1076 = vmax.f32 %v724, 0.0
      %v1077 = vmax.f32 %v729, 0.0
      %v1078 = vmax.f32 %v732, 0.0
      %v1079 = vmax.f32 %v737, 0.0
      %v1080 = vmax.f32 %v740, 0.0
      %v1081 = vmax.f32 %v745, 0.0
      %v1082 = vmax.f32 %v748, 0.0
      %v1083 = vmax.f32 %v753, 0.0
      %v1084 = vmax.f32 %v756, 0.0
      %v1085 = vmax.f32 %v761, 0.0
      %v1086 = vmax.f32 %v764, 0.0
      %v1087 = vmax.f32 %v769, 0.0
      %v1088 = vmax.f32 %v772, 0.0
      %v1089 = vmax.f32 %v777, 0.0
      %v1090 = vmax.f32 %v780, 0.0
      %v1091 = vmax.f32 %v785, 0.0
      %v1092 = vmax.f32 %v788, 0.0
      %v1093 = vmax.f32 %v793, 0.0
      %v1094 = vmax.f32 %v796, 0.0
      %v1095 = vmax.f32 %v801, 0.0
      %v1096 = vmax.f32 %v804, 0.0
      %v1097 = vmax.f32 %v809, 0.0
      %v1098 = vmax.f32 %v812, 0.0
      %v1099 = vmax.f32 %v817, 0.0
      %v1100 = vmax.f32 %v820, 0.0
      %v1101 = vmax.f32 %v825, 0.0
      %v1102 = vmax.f32 %v828, 0.0
      %v1103 = vmax.f32 %v833, 0.0
      %v1104 = vmax.f32 %v836, 0.0
      %v1105 = vmax.f32 %v841, 0.0
      %v1106 = vmax.f32 %v844, 0.0
      %v1107 = vmax.f32 %v849, 0.0
      %v1108 = vmax.f32 %v852, 0.0
      %v1109 = vmax.f32 %v857, 0.0
      %v1110 = vmax.f32 %v860, 0.0
      %v1111 = vmax.f32 %v865, 0.0
      %v1112 = vmax.f32 %v868, 0.0
      %v1113 = vmax.f32 %v873, 0.0
      %v1114 = vmax.f32 %v876, 0.0
      %v1115 = vmax.f32 %v881, 0.0
      %v1116 = vmax.f32 %v884, 0.0
      %v1117 = vmax.f32 %v889, 0.0
      %v1118 = vmax.f32 %v892, 0.0
      %v1119 = vmax.f32 %v897, 0.0
      %v1120 = vmax.f32 %v900, 0.0
      %v1121 = vmax.f32 %v905, 0.0
      %v1122 = vmax.f32 %v908, 0.0
      %v1123 = vmax.f32 %v913, 0.0
      %v1124 = vmax.f32 %v916, 0.0
      %v1125 = vmax.f32 %v921, 0.0
      %v1126 = vmax.f32 %v924, 0.0
      %v1127 = vmax.f32 %v929, 0.0
      %v1128 = vmax.f32 %v932, 0.0
      %v1129 = vmax.f32 %v937, 0.0
      %v1130 = vmax.f32 %v940, 0.0
      %v1131 = vmax.f32 %v945, 0.0
      %v1132 = vmax.f32 %v948, 0.0
      %v1133 = vmax.f32 %v953, 0.0
      %v1134 = vmax.f32 %v956, 0.0
      %v1135 = vmax.f32 %v961, 0.0
      %v1136 = vmax.f32 %v964, 0.0
      %v1137 = vmax.f32 %v969, 0.0
      %v1138 = vmax.f32 %v972, 0.0
      %v1139 = vmax.f32 %v977, 0.0
      %v1140 = vmax.f32 %v980, 0.0
      %v1141 = vmax.f32 %v985, 0.0
      %v1142 = vmax.f32 %v988, 0.0
      %v1143 = vmax.f32 %v993, 0.0
      %v1144 = vmax.f32 %v996, 0.0
      %v1145 = vmax.f32 %v1001, 0.0
      %v1146 = vmax.f32 %v1004, 0.0
      %v1147 = vmax.f32 %v1009, 0.0
      %v1148 = vmax.f32 %v1012, 0.0
      %v1149 = vmax.f32 %v1017, 0.0
      %v1150 = vmax.f32 %v1020, 0.0
      %v1151 = vmax.f32 %v1025, 0.0
      %v1152 = vmax.f32 %v1028, 0.0
      %v1153 = vmax.f32 %v1033, 0.0
      %v1154 = vmax.f32 %v1036, 0.0
      %v1155 = vmax.f32 %v1041, 0.0
      %v1156 = vmax.f32 %v1044, 0.0
      %v1157 = vmax.f32 %v1049, 0.0
      %v1158 = vmax.f32 %v1052, 0.0
      %v1159 = vmax.f32 %v1057, 0.0
      %v1160 = vmax.f32 %v1060, 0.0
      %v1161 = vpack.c.bf16 %v1064, %v1063
      %v1162 = vpack.c.bf16 %v1066, %v1065
      %v1163 = vpack.c.bf16 %v1068, %v1067
      %v1164 = vpack.c.bf16 %v1070, %v1069
      %v1165 = vpack.c.bf16 %v1072, %v1071
      %v1166 = vpack.c.bf16 %v1074, %v1073
      %v1167 = vpack.c.bf16 %v1076, %v1075
      %v1168 = vpack.c.bf16 %v1078, %v1077
      %v1169 = vpack.c.bf16 %v1080, %v1079
      %v1170 = vpack.c.bf16 %v1082, %v1081
      %v1171 = vpack.c.bf16 %v1084, %v1083
      %v1172 = vpack.c.bf16 %v1086, %v1085
      %v1173 = vpack.c.bf16 %v1088, %v1087
      %v1174 = vpack.c.bf16 %v1090, %v1089
      %v1175 = vpack.c.bf16 %v1092, %v1091
      %v1176 = vpack.c.bf16 %v1094, %v1093
      %v1177 = vpack.c.bf16 %v1096, %v1095
      %v1178 = vpack.c.bf16 %v1098, %v1097
      %v1179 = vpack.c.bf16 %v1100, %v1099
      %v1180 = vpack.c.bf16 %v1102, %v1101
      %v1181 = vpack.c.bf16 %v1104, %v1103
      %v1182 = vpack.c.bf16 %v1106, %v1105
      %v1183 = vpack.c.bf16 %v1108, %v1107
      %v1184 = vpack.c.bf16 %v1110, %v1109
      %v1185 = vpack.c.bf16 %v1112, %v1111
      %v1186 = vpack.c.bf16 %v1114, %v1113
      %v1187 = vpack.c.bf16 %v1116, %v1115
      %v1188 = vpack.c.bf16 %v1118, %v1117
      %v1189 = vpack.c.bf16 %v1120, %v1119
      %v1190 = vpack.c.bf16 %v1122, %v1121
      %v1191 = vpack.c.bf16 %v1124, %v1123
      %v1192 = vpack.c.bf16 %v1126, %v1125
      %v1193 = vpack.c.bf16 %v1128, %v1127
      %v1194 = vpack.c.bf16 %v1130, %v1129
      %v1195 = vpack.c.bf16 %v1132, %v1131
      %v1196 = vpack.c.bf16 %v1134, %v1133
      %v1197 = vpack.c.bf16 %v1136, %v1135
      %v1198 = vpack.c.bf16 %v1138, %v1137
      %v1199 = vpack.c.bf16 %v1140, %v1139
      %v1200 = vpack.c.bf16 %v1142, %v1141
      %v1201 = vpack.c.bf16 %v1144, %v1143
      %v1202 = vpack.c.bf16 %v1146, %v1145
      %v1203 = vpack.c.bf16 %v1148, %v1147
      %v1204 = vpack.c.bf16 %v1150, %v1149
      %v1205 = vpack.c.bf16 %v1152, %v1151
      %v1206 = vpack.c.bf16 %v1154, %v1153
      %v1207 = vpack.c.bf16 %v1156, %v1155
      %v1208 = vpack.c.bf16 %v1158, %v1157
      %v1209 = vpack.c.bf16 %v1160, %v1159
      %v1259 = vunpack.c.l.b16 %v1161
      %v1260 = vunpack.c.h.b16 %v1161
      %v1261 = vunpack.c.l.b16 %v1162
      %v1262 = vunpack.c.h.b16 %v1162
      %v1263 = vunpack.c.l.b16 %v1163
      %v1264 = vunpack.c.h.b16 %v1163
      %v1265 = vunpack.c.l.b16 %v1164
      %v1266 = vunpack.c.h.b16 %v1164
      %v1267 = vunpack.c.l.b16 %v1165
      %v1268 = vunpack.c.h.b16 %v1165
      %v1269 = vunpack.c.l.b16 %v1166
      %v1270 = vunpack.c.h.b16 %v1166
      %v1271 = vunpack.c.l.b16 %v1167
      %v1272 = vunpack.c.h.b16 %v1167
      %v1273 = vunpack.c.l.b16 %v1168
      %v1274 = vunpack.c.h.b16 %v1168
      %v1275 = vunpack.c.l.b16 %v1169
      %v1276 = vunpack.c.h.b16 %v1169
      %v1277 = vunpack.c.l.b16 %v1170
      %v1278 = vunpack.c.h.b16 %v1170
      %v1279 = vunpack.c.l.b16 %v1171
      %v1280 = vunpack.c.h.b16 %v1171
      %v1281 = vunpack.c.l.b16 %v1172
      %v1282 = vunpack.c.h.b16 %v1172
      %v1283 = vunpack.c.l.b16 %v1173
      %v1284 = vunpack.c.h.b16 %v1173
      %v1285 = vunpack.c.l.b16 %v1174
      %v1286 = vunpack.c.h.b16 %v1174
      %v1287 = vunpack.c.l.b16 %v1175
      %v1288 = vunpack.c.h.b16 %v1175
      %v1289 = vunpack.c.l.b16 %v1176
      %v1290 = vunpack.c.h.b16 %v1176
      %v1291 = vunpack.c.l.b16 %v1177
      %v1292 = vunpack.c.h.b16 %v1177
      %v1293 = vunpack.c.l.b16 %v1178
      %v1294 = vunpack.c.h.b16 %v1178
      %v1295 = vunpack.c.l.b16 %v1179
      %v1296 = vunpack.c.h.b16 %v1179
      %v1297 = vunpack.c.l.b16 %v1180
      %v1298 = vunpack.c.h.b16 %v1180
      %v1299 = vunpack.c.l.b16 %v1181
      %v1300 = vunpack.c.h.b16 %v1181
      %v1301 = vunpack.c.l.b16 %v1182
      %v1302 = vunpack.c.h.b16 %v1182
      %v1303 = vunpack.c.l.b16 %v1183
      %v1304 = vunpack.c.h.b16 %v1183
      %v1305 = vunpack.c.l.b16 %v1184
      %v1306 = vunpack.c.h.b16 %v1184
      %v1307 = vunpack.c.l.b16 %v1185
      %v1308 = vunpack.c.h.b16 %v1185
      %v1309 = vunpack.c.l.b16 %v1186
      %v1310 = vunpack.c.h.b16 %v1186
      %v1311 = vunpack.c.l.b16 %v1187
      %v1312 = vunpack.c.h.b16 %v1187
      %v1313 = vunpack.c.l.b16 %v1188
      %v1314 = vunpack.c.h.b16 %v1188
      %v1315 = vunpack.c.l.b16 %v1189
      %v1316 = vunpack.c.h.b16 %v1189
      %v1317 = vunpack.c.l.b16 %v1190
      %v1318 = vunpack.c.h.b16 %v1190
      %v1319 = vunpack.c.l.b16 %v1191
      %v1320 = vunpack.c.h.b16 %v1191
      %v1321 = vunpack.c.l.b16 %v1192
      %v1322 = vunpack.c.h.b16 %v1192
      %v1323 = vunpack.c.l.b16 %v1193
      %v1324 = vunpack.c.h.b16 %v1193
      %v1325 = vunpack.c.l.b16 %v1194
      %v1326 = vunpack.c.h.b16 %v1194
      %v1327 = vunpack.c.l.b16 %v1195
      %v1328 = vunpack.c.h.b16 %v1195
      %v1329 = vunpack.c.l.b16 %v1196
      %v1330 = vunpack.c.h.b16 %v1196
      %v1331 = vunpack.c.l.b16 %v1197
      %v1332 = vunpack.c.h.b16 %v1197
      %v1333 = vunpack.c.l.b16 %v1198
      %v1334 = vunpack.c.h.b16 %v1198
      %v1335 = vunpack.c.l.b16 %v1199
      %v1336 = vunpack.c.h.b16 %v1199
      %v1337 = vunpack.c.l.b16 %v1200
      %v1338 = vunpack.c.h.b16 %v1200
      %v1339 = vunpack.c.l.b16 %v1201
      %v1340 = vunpack.c.h.b16 %v1201
      %v1341 = vunpack.c.l.b16 %v1202
      %v1342 = vunpack.c.h.b16 %v1202
      %v1343 = vunpack.c.l.b16 %v1203
      %v1344 = vunpack.c.h.b16 %v1203
      %v1345 = vunpack.c.l.b16 %v1204
      %v1346 = vunpack.c.h.b16 %v1204
      %v1347 = vunpack.c.l.b16 %v1205
      %v1348 = vunpack.c.h.b16 %v1205
      %v1349 = vunpack.c.l.b16 %v1206
      %v1350 = vunpack.c.h.b16 %v1206
      %v1351 = vunpack.c.l.b16 %v1207
      %v1352 = vunpack.c.h.b16 %v1207
      %v1353 = vunpack.c.l.b16 %v1208
      %v1354 = vunpack.c.h.b16 %v1208
      %v1355 = vunpack.c.l.b16 %v1209
      %v1356 = vunpack.c.h.b16 %v1209
      %v1357 = vpack.c.b16 %v1259, %v1259
      %v1358 = vpack.c.b16 %v1260, %v1260
      %v1359 = vpack.c.b16 %v1261, %v1261
      %v1360 = vpack.c.b16 %v1262, %v1262
      %v1361 = vpack.c.b16 %v1263, %v1263
      %v1362 = vpack.c.b16 %v1264, %v1264
      %v1363 = vpack.c.b16 %v1265, %v1265
      %v1364 = vpack.c.b16 %v1266, %v1266
      %v1365 = vpack.c.b16 %v1267, %v1267
      %v1366 = vpack.c.b16 %v1268, %v1268
      %v1367 = vpack.c.b16 %v1269, %v1269
      %v1368 = vpack.c.b16 %v1270, %v1270
      %v1369 = vpack.c.b16 %v1271, %v1271
      %v1370 = vpack.c.b16 %v1272, %v1272
      %v1371 = vpack.c.b16 %v1273, %v1273
      %v1372 = vpack.c.b16 %v1274, %v1274
      %v1373 = vpack.c.b16 %v1275, %v1275
      %v1374 = vpack.c.b16 %v1276, %v1276
      %v1375 = vpack.c.b16 %v1277, %v1277
      %v1376 = vpack.c.b16 %v1278, %v1278
      %v1377 = vpack.c.b16 %v1279, %v1279
      %v1378 = vpack.c.b16 %v1280, %v1280
      %v1379 = vpack.c.b16 %v1281, %v1281
      %v1380 = vpack.c.b16 %v1282, %v1282
      %v1381 = vpack.c.b16 %v1283, %v1283
      %v1382 = vpack.c.b16 %v1284, %v1284
      %v1383 = vpack.c.b16 %v1285, %v1285
      %v1384 = vpack.c.b16 %v1286, %v1286
      %v1385 = vpack.c.b16 %v1287, %v1287
      %v1386 = vpack.c.b16 %v1288, %v1288
      %v1387 = vpack.c.b16 %v1289, %v1289
      %v1388 = vpack.c.b16 %v1290, %v1290
      %v1389 = vpack.c.b16 %v1291, %v1291
      %v1390 = vpack.c.b16 %v1292, %v1292
      %v1391 = vpack.c.b16 %v1293, %v1293
      %v1392 = vpack.c.b16 %v1294, %v1294
      %v1393 = vpack.c.b16 %v1295, %v1295
      %v1394 = vpack.c.b16 %v1296, %v1296
      %v1395 = vpack.c.b16 %v1297, %v1297
      %v1396 = vpack.c.b16 %v1298, %v1298
      %v1397 = vpack.c.b16 %v1299, %v1299
      %v1398 = vpack.c.b16 %v1300, %v1300
      %v1399 = vpack.c.b16 %v1301, %v1301
      %v1400 = vpack.c.b16 %v1302, %v1302
      %v1401 = vpack.c.b16 %v1303, %v1303
      %v1402 = vpack.c.b16 %v1304, %v1304
      %v1403 = vpack.c.b16 %v1305, %v1305
      %v1404 = vpack.c.b16 %v1306, %v1306
      %v1405 = vpack.c.b16 %v1307, %v1307
      %v1406 = vpack.c.b16 %v1308, %v1308
      %v1407 = vpack.c.b16 %v1309, %v1309
      %v1408 = vpack.c.b16 %v1310, %v1310
      %v1409 = vpack.c.b16 %v1311, %v1311
      %v1410 = vpack.c.b16 %v1312, %v1312
      %v1411 = vpack.c.b16 %v1313, %v1313
      %v1412 = vpack.c.b16 %v1314, %v1314
      %v1413 = vpack.c.b16 %v1315, %v1315
      %v1414 = vpack.c.b16 %v1316, %v1316
      %v1415 = vpack.c.b16 %v1317, %v1317
      %v1416 = vpack.c.b16 %v1318, %v1318
      %v1417 = vpack.c.b16 %v1319, %v1319
      %v1418 = vpack.c.b16 %v1320, %v1320
      %v1419 = vpack.c.b16 %v1321, %v1321
      %v1420 = vpack.c.b16 %v1322, %v1322
      %v1421 = vpack.c.b16 %v1323, %v1323
      %v1422 = vpack.c.b16 %v1324, %v1324
      %v1423 = vpack.c.b16 %v1325, %v1325
      %v1424 = vpack.c.b16 %v1326, %v1326
      %v1425 = vpack.c.b16 %v1327, %v1327
      %v1426 = vpack.c.b16 %v1328, %v1328
      %v1427 = vpack.c.b16 %v1329, %v1329
      %v1428 = vpack.c.b16 %v1330, %v1330
      %v1429 = vpack.c.b16 %v1331, %v1331
      %v1430 = vpack.c.b16 %v1332, %v1332
      %v1431 = vpack.c.b16 %v1333, %v1333
      %v1432 = vpack.c.b16 %v1334, %v1334
      %v1433 = vpack.c.b16 %v1335, %v1335
      %v1434 = vpack.c.b16 %v1336, %v1336
      %v1435 = vpack.c.b16 %v1337, %v1337
      %v1436 = vpack.c.b16 %v1338, %v1338
      %v1437 = vpack.c.b16 %v1339, %v1339
      %v1438 = vpack.c.b16 %v1340, %v1340
      %v1439 = vpack.c.b16 %v1341, %v1341
      %v1440 = vpack.c.b16 %v1342, %v1342
      %v1441 = vpack.c.b16 %v1343, %v1343
      %v1442 = vpack.c.b16 %v1344, %v1344
      %v1443 = vpack.c.b16 %v1345, %v1345
      %v1444 = vpack.c.b16 %v1346, %v1346
      %v1445 = vpack.c.b16 %v1347, %v1347
      %v1446 = vpack.c.b16 %v1348, %v1348
      %v1447 = vpack.c.b16 %v1349, %v1349
      %v1448 = vpack.c.b16 %v1350, %v1350
      %v1449 = vpack.c.b16 %v1351, %v1351
      %v1450 = vpack.c.b16 %v1352, %v1352
      %v1451 = vpack.c.b16 %v1353, %v1353
      %v1452 = vpack.c.b16 %v1354, %v1354
      %v1453 = vpack.c.b16 %v1355, %v1355
      %v1454 = vpack.c.b16 %v1356, %v1356
      %1553 = vst [vmem:[%s172] sm:$0xf] %v1357
      %1554 = vst [vmem:[%s172 + $0x4] sm:$0xf] %v1358
      %1555 = vst [vmem:[%s172 + $0x8] sm:$0xf] %v1359
      %1556 = vst [vmem:[%s172 + $0xc] sm:$0xf] %v1360
      %1557 = vst [vmem:[%s172 + $0x10] sm:$0xf] %v1361
      %1558 = vst [vmem:[%s172 + $0x14] sm:$0xf] %v1362
      %1559 = vst [vmem:[%s172 + $0x18] sm:$0xf] %v1363
      %1560 = vst [vmem:[%s172 + $0x1c] sm:$0xf] %v1364
      %1561 = vst [vmem:[%s172 + $0x20] sm:$0xf] %v1365
      %1562 = vst [vmem:[%s172 + $0x24] sm:$0xf] %v1366
      %1563 = vst [vmem:[%s172 + $0x28] sm:$0xf] %v1367
      %1564 = vst [vmem:[%s172 + $0x2c] sm:$0xf] %v1368
      %1565 = vst [vmem:[%s172 + $0x30] sm:$0xf] %v1369
      %1566 = vst [vmem:[%s172 + $0x34] sm:$0xf] %v1370
      %1567 = vst [vmem:[%s172 + $0x38] sm:$0xf] %v1371
      %1568 = vst [vmem:[%s172 + $0x3c] sm:$0xf] %v1372
      %1569 = vst [vmem:[%s172 + $0x40] sm:$0xf] %v1373
      %1570 = vst [vmem:[%s172 + $0x44] sm:$0xf] %v1374
      %1571 = vst [vmem:[%s172 + $0x48] sm:$0xf] %v1375
      %1572 = vst [vmem:[%s172 + $0x4c] sm:$0xf] %v1376
      %1573 = vst [vmem:[%s172 + $0x50] sm:$0xf] %v1377
      %1574 = vst [vmem:[%s172 + $0x54] sm:$0xf] %v1378
      %1575 = vst [vmem:[%s172 + $0x58] sm:$0xf] %v1379
      %1576 = vst [vmem:[%s172 + $0x5c] sm:$0xf] %v1380
      %1577 = vst [vmem:[%s172 + $0x60] sm:$0xf] %v1381
      %1578 = vst [vmem:[%s172 + $0x64] sm:$0xf] %v1382
      %1579 = vst [vmem:[%s172 + $0x68] sm:$0xf] %v1383
      %1580 = vst [vmem:[%s172 + $0x6c] sm:$0xf] %v1384
      %1581 = vst [vmem:[%s172 + $0x70] sm:$0xf] %v1385
      %1582 = vst [vmem:[%s172 + $0x74] sm:$0xf] %v1386
      %1583 = vst [vmem:[%s172 + $0x78] sm:$0xf] %v1387
      %1584 = vst [vmem:[%s172 + $0x7c] sm:$0xf] %v1388
      %1585 = vst [vmem:[%s172 + $0x80] sm:$0xf] %v1389
      %1586 = vst [vmem:[%s172 + $0x84] sm:$0xf] %v1390
      %1587 = vst [vmem:[%s172 + $0x88] sm:$0xf] %v1391
      %1588 = vst [vmem:[%s172 + $0x8c] sm:$0xf] %v1392
      %1589 = vst [vmem:[%s172 + $0x90] sm:$0xf] %v1393
      %1590 = vst [vmem:[%s172 + $0x94] sm:$0xf] %v1394
      %1591 = vst [vmem:[%s172 + $0x98] sm:$0xf] %v1395
      %1592 = vst [vmem:[%s172 + $0x9c] sm:$0xf] %v1396
      %1593 = vst [vmem:[%s172 + $0xa0] sm:$0xf] %v1397
      %1594 = vst [vmem:[%s172 + $0xa4] sm:$0xf] %v1398
      %1595 = vst [vmem:[%s172 + $0xa8] sm:$0xf] %v1399
      %1596 = vst [vmem:[%s172 + $0xac] sm:$0xf] %v1400
      %1597 = vst [vmem:[%s172 + $0xb0] sm:$0xf] %v1401
      %1598 = vst [vmem:[%s172 + $0xb4] sm:$0xf] %v1402
      %1599 = vst [vmem:[%s172 + $0xb8] sm:$0xf] %v1403
      %1600 = vst [vmem:[%s172 + $0xbc] sm:$0xf] %v1404
      %1601 = vst [vmem:[%s172 + $0xc0] sm:$0xf] %v1405
      %1602 = vst [vmem:[%s172 + $0xc4] sm:$0xf] %v1406
      %1603 = vst [vmem:[%s172 + $0xc8] sm:$0xf] %v1407
      %1604 = vst [vmem:[%s172 + $0xcc] sm:$0xf] %v1408
      %1605 = vst [vmem:[%s172 + $0xd0] sm:$0xf] %v1409
      %1606 = vst [vmem:[%s172 + $0xd4] sm:$0xf] %v1410
      %1607 = vst [vmem:[%s172 + $0xd8] sm:$0xf] %v1411
      %1608 = vst [vmem:[%s172 + $0xdc] sm:$0xf] %v1412
      %1609 = vst [vmem:[%s172 + $0xe0] sm:$0xf] %v1413
      %1610 = vst [vmem:[%s172 + $0xe4] sm:$0xf] %v1414
      %1611 = vst [vmem:[%s172 + $0xe8] sm:$0xf] %v1415
      %1612 = vst [vmem:[%s172 + $0xec] sm:$0xf] %v1416
      %1613 = vst [vmem:[%s172 + $0xf0] sm:$0xf] %v1417
      %1614 = vst [vmem:[%s172 + $0xf4] sm:$0xf] %v1418
      %1615 = vst [vmem:[%s172 + $0xf8] sm:$0xf] %v1419
      %1616 = vst [vmem:[%s172 + $0xfc] sm:$0xf] %v1420
      %1617 = vst [vmem:[%s172 + $0x100] sm:$0xf] %v1421
      %1618 = vst [vmem:[%s172 + $0x104] sm:$0xf] %v1422
      %1619 = vst [vmem:[%s172 + $0x108] sm:$0xf] %v1423
      %1620 = vst [vmem:[%s172 + $0x10c] sm:$0xf] %v1424
      %1621 = vst [vmem:[%s172 + $0x110] sm:$0xf] %v1425
      %1622 = vst [vmem:[%s172 + $0x114] sm:$0xf] %v1426
      %1623 = vst [vmem:[%s172 + $0x118] sm:$0xf] %v1427
      %1624 = vst [vmem:[%s172 + $0x11c] sm:$0xf] %v1428
      %1625 = vst [vmem:[%s172 + $0x120] sm:$0xf] %v1429
      %1626 = vst [vmem:[%s172 + $0x124] sm:$0xf] %v1430
      %1627 = vst [vmem:[%s172 + $0x128] sm:$0xf] %v1431
      %1628 = vst [vmem:[%s172 + $0x12c] sm:$0xf] %v1432
      %1629 = vst [vmem:[%s172 + $0x130] sm:$0xf] %v1433
      %1630 = vst [vmem:[%s172 + $0x134] sm:$0xf] %v1434
      %1631 = vst [vmem:[%s172 + $0x138] sm:$0xf] %v1435
      %1632 = vst [vmem:[%s172 + $0x13c] sm:$0xf] %v1436
      %1633 = vst [vmem:[%s172 + $0x140] sm:$0xf] %v1437
      %1634 = vst [vmem:[%s172 + $0x144] sm:$0xf] %v1438
      %1635 = vst [vmem:[%s172 + $0x148] sm:$0xf] %v1439
      %1636 = vst [vmem:[%s172 + $0x14c] sm:$0xf] %v1440
      %1637 = vst [vmem:[%s172 + $0x150] sm:$0xf] %v1441
      %1638 = vst [vmem:[%s172 + $0x154] sm:$0xf] %v1442
      %1639 = vst [vmem:[%s172 + $0x158] sm:$0xf] %v1443
      %1640 = vst [vmem:[%s172 + $0x15c] sm:$0xf] %v1444
      %1641 = vst [vmem:[%s172 + $0x160] sm:$0xf] %v1445
      %1642 = vst [vmem:[%s172 + $0x164] sm:$0xf] %v1446
      %1643 = vst [vmem:[%s172 + $0x168] sm:$0xf] %v1447
      %1644 = vst [vmem:[%s172 + $0x16c] sm:$0xf] %v1448
      %1645 = vst [vmem:[%s172 + $0x170] sm:$0xf] %v1449
      %1646 = vst [vmem:[%s172 + $0x174] sm:$0xf] %v1450
      %1647 = vst [vmem:[%s172 + $0x178] sm:$0xf] %v1451
      %1648 = vst [vmem:[%s172 + $0x17c] sm:$0xf] %v1452
      %1649 = vst [vmem:[%s172 + $0x180] sm:$0xf] %v1453
      %1650 = vst [vmem:[%s172 + $0x184] sm:$0xf] %v1454
      %s1651 = smul.u32 98, %s14
      %p1652 = scmp.lt.s32.totalorder %s1651, 195
      %s1653 = scalar_select %p1652, %s1651, 195
      %s1654 = smul.addr %s1653, 4
      %s1655 = scalar_lea.vmem %s3, %s1654
      // Predicated region
      $region33: #{net_forward.3} parent=31 // pred_check
        %p1656 = pneg %p100
      $region34: #{net_forward.3} parent=31 // pred_check_branch
        %1658 = sbr.rel (%p1656) target = $region36
      $region35: #{net_forward.3} parent=31 // pred_region
        %s1659 = smul.u32 98, %s14
      $region36: #{net_forward.3} parent=31 // pred_fallthru
        _
    $region32: #{net_forward.3} parent=5 // pred_fallthru
      _
    %p1660 = scmp.le.s32.totalorder 2, %s9
    // Predicated region
    $region37: #{net_forward.3} parent=5 // pred_check
      %p1661 = pneg %p1660
    $region38: #{net_forward.3} parent=5 // pred_check_branch
      %1663 = sbr.rel (%p1661) target = $region40
    $region39: #{net_forward.3} parent=5 // pred_region
      %s1664 = ssub.s32 %s9, 2
      // Predicated region
      $region41: #{net_forward.3} parent=39 // pred_check
        %p1665 = pneg %p106
      $region42: #{net_forward.3} parent=39 // pred_check_branch
        %1667 = sbr.rel (%p1665) target = $region44
      $region43: #{net_forward.3} parent=39 // pred_region
        %s1668 = smul.u32 98, %s15
        %p1669 = scmp.lt.s32.totalorder %s1668, 195
        %s1670 = scalar_select %p1669, %s1668, 195
        %s1671 = smul.addr %s1670, 4
        %s1672 = scalar_lea.vmem %s3, %s1671
      $region44: #{net_forward.3} parent=39 // pred_fallthru
        _
    $region40: #{net_forward.3} parent=5 // pred_fallthru
      _
  $region6: #{net_forward.3} parent=0 // loop_footer
    %s13 = sadd.s32 1, %s9
  $region7: #{net_forward.3} parent=0 // loop_footer_branch
    %8 = sbr.rel target = $region3
  $region8: #{net_forward.3} parent=0 // loop_exit
    _

// kernel: net_forward.4
$region0: #{net_forward.4}
  #allocation0 [shape = 'u32[]', space=smem, size = 0x4, offset = 0x4, fixed_abs, tag = 'smem constant byte address 0x4 - core index']
  #allocation1 [shape = 'u32[144,128]{1,0:T(1,128)}', space=vmem, size = 0x12000, scoped, tag = 'internal scratch']
  %s0 = inlined_call_operand.vmem [shape: bf16[200,256], index: 0, kind: input, shape index: {}]
  %s1 = inlined_call_operand.vmem [shape: bf16[256,128], index: 1, kind: input, shape index: {}]
  %s2 = inlined_call_operand.vmem [shape: f32[1,128], index: 2, kind: input, shape index: {}]
  %s3 = inlined_call_operand.vmem [shape: bf16[200,128], index: 3, kind: output, shape index: {}]
  %s4 = sld [smem:[#allocation0]]
  $region89: #{net_forward.4} parent=0
    _
  %s6 = ssub.s32 1, %s4
  %s7 = scalar_select 0, %s6, %s4
  $region1: #{net_forward.4} parent=0
    #allocation2 [shape = 'u8[57344]{0}', space=vmem, size = 0xe000, scoped, tag = 'output window, operand 0']
    loop: start=0, step=1, limit=4
    $region2: #{net_forward.4} parent=1 // loop_pre_header
      _
    $region3: #{net_forward.4} parent=1 // loop_header
      %s9 = sphi 0, %s13
      %p10 = scmp.ge.s32.totalorder %s9, 4
      %s19 = sphi 0, %s21
      %s22 = sphi 0, %s19
      %s23 = sphi 0, %s22
      %s39 = sphi 0, %s23
      %s43 = sphi 0, %s43
      %s45 = sphi 0, %s43
      %s46 = sphi 0, %s45
      %s60 = sphi 0, %s46
      %s64 = sphi 0, %s64
      %s66 = sphi 0, %s64
      %s67 = sphi 0, %s66
      %s81 = sphi 0, %s67
      %s87 = sphi 0, %s89
      %s90 = sphi 0, %s87
      %s91 = sphi 0, %s90
      %s107 = sphi 0, %s91
    $region4: #{net_forward.4} parent=1 // loop_header_branch
      %12 = sbr.rel (%p10) target = $region8
    $region5: #{net_forward.4} parent=1 // loop_body
      %s14 = ssub.s32 %s9, 1
      %s15 = ssub.s32 %s9, 2
      %s16 = sadd.s32 %s9, 1
      %s17 = ssub.s32 %s9, %s16
      %p18 = scmp.eq.s32.totalorder %s17, 0
      %s20 = sadd.s32 %s19, 1
      %s21 = scalar_select %p18, %s19, %s20
      %p24 = pneg %p18
      %p25 = scmp.eq.s32.totalorder %s9, 1
      %p26 = por %p24, %p25
      %p27 = scmp.ne.s32.totalorder %s19, %s22
      %p28 = scmp.eq.s32.totalorder %s9, 0
      %p29 = por %p27, %p28
      %p30 = scmp.ne.s32.totalorder %s19, %s22
      %p31 = scmp.eq.s32.totalorder %s14, 1
      %p32 = por %p30, %p31
      %p33 = scmp.ne.s32.totalorder %s22, %s23
      %p34 = scmp.eq.s32.totalorder %s14, 0
      %p35 = por %p33, %p34
      %p36 = scmp.ne.s32.totalorder %s22, %s23
      %p37 = scmp.eq.s32.totalorder %s15, 1
      %p38 = por %p36, %p37
      %p40 = scmp.ne.s32.totalorder %s23, %s39
      %p41 = scmp.eq.s32.totalorder %s15, 0
      %p42 = por %p40, %p41
      %s44 = sadd.s32 %s43, 1
      %p47 = scmp.eq.s32.totalorder %s9, 1
      %p48 = scmp.ne.s32.totalorder %s43, %s45
      %p49 = scmp.eq.s32.totalorder %s9, 0
      %p50 = por %p48, %p49
      %p51 = scmp.ne.s32.totalorder %s43, %s45
      %p52 = scmp.eq.s32.totalorder %s14, 1
      %p53 = por %p51, %p52
      %p54 = scmp.ne.s32.totalorder %s45, %s46
      %p55 = scmp.eq.s32.totalorder %s14, 0
      %p56 = por %p54, %p55
      %p57 = scmp.ne.s32.totalorder %s45, %s46
      %p58 = scmp.eq.s32.totalorder %s15, 1
      %p59 = por %p57, %p58
      %p61 = scmp.ne.s32.totalorder %s46, %s60
      %p62 = scmp.eq.s32.totalorder %s15, 0
      %p63 = por %p61, %p62
      %s65 = sadd.s32 %s64, 1
      %p68 = scmp.eq.s32.totalorder %s9, 1
      %p69 = scmp.ne.s32.totalorder %s64, %s66
      %p70 = scmp.eq.s32.totalorder %s9, 0
      %p71 = por %p69, %p70
      %p72 = scmp.ne.s32.totalorder %s64, %s66
      %p73 = scmp.eq.s32.totalorder %s14, 1
      %p74 = por %p72, %p73
      %p75 = scmp.ne.s32.totalorder %s66, %s67
      %p76 = scmp.eq.s32.totalorder %s14, 0
      %p77 = por %p75, %p76
      %p78 = scmp.ne.s32.totalorder %s66, %s67
      %p79 = scmp.eq.s32.totalorder %s15, 1
      %p80 = por %p78, %p79
      %p82 = scmp.ne.s32.totalorder %s67, %s81
      %p83 = scmp.eq.s32.totalorder %s15, 0
      %p84 = por %p82, %p83
      %s85 = ssub.s32 %s9, %s16
      %p86 = scmp.eq.s32.totalorder %s85, 0
      %s88 = sadd.s32 %s87, 1
      %s89 = scalar_select %p86, %s87, %s88
      %p92 = pneg %p86
      %p93 = scmp.eq.s32.totalorder %s9, 1
      %p94 = por %p92, %p93
      %p95 = scmp.ne.s32.totalorder %s87, %s90
      %p96 = scmp.eq.s32.totalorder %s9, 0
      %p97 = por %p95, %p96
      %p98 = scmp.ne.s32.totalorder %s87, %s90
      %p99 = scmp.eq.s32.totalorder %s14, 1
      %p100 = por %p98, %p99
      %p101 = scmp.ne.s32.totalorder %s90, %s91
      %p102 = scmp.eq.s32.totalorder %s14, 0
      %p103 = por %p101, %p102
      %p104 = scmp.ne.s32.totalorder %s90, %s91
      %p105 = scmp.eq.s32.totalorder %s15, 1
      %p106 = por %p104, %p105
      %p108 = scmp.ne.s32.totalorder %s91, %s107
      %p109 = scmp.eq.s32.totalorder %s15, 0
      %p110 = por %p108, %p109
      %p111 = scmp.le.s32.totalorder 1, %s9
      %p112 = scmp.lt.s32.totalorder %s9, 3
      %p113 = pnand %p111, %p112
      %p114 = pneg %p113
      // Predicated region
      $region9: #{net_forward.4} parent=5 // pred_check
        _
      $region10: #{net_forward.4} parent=5 // pred_check_branch
        %116 = sbr.rel (%p113) target = $region12
      $region11: #{net_forward.4} parent=5 // pred_region
        %s117 = ssub.s32 %s9, 1
        // Predicated region
        $region13: #{net_forward.4} parent=11 // pred_check
          %p118 = pneg %p56
        $region14: #{net_forward.4} parent=11 // pred_check_branch
          %120 = sbr.rel (%p118) target = $region16
        $region15: #{net_forward.4} parent=11 // pred_region
          _
        $region16: #{net_forward.4} parent=11 // pred_fallthru
          _
        // Predicated region
        $region17: #{net_forward.4} parent=11 // pred_check
          %p121 = pneg %p77
        $region18: #{net_forward.4} parent=11 // pred_check_branch
          %123 = sbr.rel (%p121) target = $region20
        $region19: #{net_forward.4} parent=11 // pred_region
          _
        $region20: #{net_forward.4} parent=11 // pred_fallthru
          _
      $region12: #{net_forward.4} parent=5 // pred_fallthru
        _
      %p124 = scmp.lt.s32.totalorder %s9, 2
      // Predicated region
      $region21: #{net_forward.4} parent=5 // pred_check
        %p125 = pneg %p124
      $region22: #{net_forward.4} parent=5 // pred_check_branch
        %127 = sbr.rel (%p125) target = $region24
      $region23: #{net_forward.4} parent=5 // pred_region
        // Predicated region
        $region25: #{net_forward.4} parent=23 // pred_check
          %p128 = pneg %p29
        $region26: #{net_forward.4} parent=23 // pred_check_branch
          %130 = sbr.rel (%p128) target = $region28
        $region27: #{net_forward.4} parent=23 // pred_region
          %s131 = smul.u32 14, %s9
          %s132 = ssub.s32 25, %s131
          %p133 = scmp.lt.s32.totalorder %s132, 14
          %s134 = scalar_select %p133, %s132, 14
          %s135 = smul.u32 64, %s134
          %s136 = smul.u32 %s135, 2
          %p137 = scmp.lt.s32.totalorder %s131, 24
          %s138 = scalar_select %p137, %s131, 24
          %s139 = smul.addr %s138, 2
          %s140 = smul.addr %s139, 4
          %s141 = scalar_lea.vmem %s0, %s140
          %s142 = smul.u32 14, %s9
          %s143 = ssub.s32 25, %s142
          %p144 = scmp.lt.s32.totalorder %s143, 14
          %s145 = scalar_select %p144, %s143, 14
          %s146 = smul.u32 64, %s145
          %s147 = smul.u32 %s146, 2
        $region28: #{net_forward.4} parent=23 // pred_fallthru
          _
      $region24: #{net_forward.4} parent=5 // pred_fallthru
        _
      %p148 = scmp.le.s32.totalorder 1, %s9
      %p149 = scmp.lt.s32.totalorder %s9, 3
      %p150 = pnand %p148, %p149
      %p151 = pneg %p150
      // Predicated region
      $region29: #{net_forward.4} parent=5 // pred_check
        _
      $region30: #{net_forward.4} parent=5 // pred_check_branch
        %153 = sbr.rel (%p150) target = $region32
      $region31: #{net_forward.4} parent=5 // pred_region
        %s154 = ssub.s32 %s9, 1
        %s155 = smul.u32 14, %s14
        %s156 = ssub.s32 25, %s155
        %p157 = scmp.lt.s32.totalorder %s156, 14
        %s158 = scalar_select %p157, %s156, 14
        %s159 = smul.u32 64, %s158
        %s160 = smul.u32 %s159, 2
        %p161 = scmp.lt.s32.totalorder %s155, 24
        %s162 = scalar_select %p161, %s155, 24
        %s163 = smul.addr %s162, 2
        %s164 = smul.addr %s163, 4
        %s165 = scalar_lea.vmem %s0, %s164
        %p166 = pneg %p35
        %p167 = pneg %p32
        %p168 = pneg %p56
        %p169 = pneg %p53
        %p170 = pneg %p77
        %p171 = pneg %p74
        %p172 = pneg %p103
        %p173 = pneg %p100
        %s174 = sand.u32 %s90, 1
        %s175 = sand.u32 %s90, 1
        %s176 = smul.addr %s175, 56
        %s177 = scalar_lea.vmem [#allocation2], %s176
        %s178 = smul.u32 14, %s14
        %s179 = ssub.s32 25, %s178
        %p180 = scmp.lt.s32.totalorder %s179, 14
        %s181 = scalar_select %p180, %s179, 14
        %s182 = smul.u32 64, %s181
        %s183 = smul.u32 %s182, 2
        %p184 = scmp.lt.s32.totalorder %s178, 24
        %s185 = scalar_select %p184, %s178, 24
        %s186 = smul.addr %s185, 2
        %s187 = smul.addr %s186, 4
        %s188 = scalar_lea.vmem %s0, %s187
        %s189 = smul.u32 14, %s14
        %s190 = ssub.s32 25, %s189
        %p191 = scmp.lt.s32.totalorder %s190, 14
        %s192 = scalar_select %p191, %s190, 14
        %s193 = smul.u32 64, %s192
        %s194 = smul.u32 %s193, 2
        %s195 = smul.u32 14, %s14
        %s196 = ssub.s32 25, %s195
        %p197 = scmp.lt.s32.totalorder %s196, 14
        %s198 = scalar_select %p197, %s196, 14
        %s199 = smul.u32 64, %s198
        %v201 = vld [vmem:[%s188] sm:$0xff]
        %v202 = vld [vmem:[%s188 + $0x8] sm:$0xff]
        %v203 = vld [vmem:[%s188 + $0x10] sm:$0xff]
        %v204 = vld [vmem:[%s188 + $0x18] sm:$0xff]
        %v205 = vld [vmem:[%s188 + $0x20] sm:$0xff]
        %v206 = vld [vmem:[%s188 + $0x28] sm:$0xff]
        %v207 = vld [vmem:[%s188 + $0x30] sm:$0xff]
        %v208 = vld [vmem:[%s188 + $0x38] sm:$0xff]
        %v209 = vld [vmem:[%s188 + $0x40] sm:$0xff]
        %v210 = vld [vmem:[%s188 + $0x48] sm:$0xff]
        %v211 = vld [vmem:[%s188 + $0x50] sm:$0xff]
        %v212 = vld [vmem:[%s188 + $0x58] sm:$0xff]
        %v213 = vld [vmem:[%s188 + $0x60] sm:$0xff]
        %v214 = vld [vmem:[%s188 + $0x68] sm:$0xff]
        %v215 = vld [vmem:[%s1] sm:$0xf]
        %v216 = vld [vmem:[%s1 + $0x4] sm:$0xf]
        %v217 = vld [vmem:[%s1 + $0x8] sm:$0xf]
        %v218 = vld [vmem:[%s1 + $0xc] sm:$0xf]
        %v219 = vld [vmem:[%s1 + $0x10] sm:$0xf]
        %v220 = vld [vmem:[%s1 + $0x14] sm:$0xf]
        %v221 = vld [vmem:[%s1 + $0x18] sm:$0xf]
        %v222 = vld [vmem:[%s1 + $0x1c] sm:$0xf]
        %v223 = vld [vmem:[%s1 + $0x20] sm:$0xf]
        %v224 = vld [vmem:[%s1 + $0x24] sm:$0xf]
        %v225 = vld [vmem:[%s1 + $0x28] sm:$0xf]
        %v226 = vld [vmem:[%s1 + $0x2c] sm:$0xf]
        %v227 = vld [vmem:[%s1 + $0x30] sm:$0xf]
        %v228 = vld [vmem:[%s1 + $0x34] sm:$0xf]
        %v229 = vld [vmem:[%s1 + $0x38] sm:$0xf]
        %v230 = vld [vmem:[%s1 + $0x3c] sm:$0xf]
        %v231 = vld [vmem:[%s1 + $0x40] sm:$0xf]
        %v232 = vld [vmem:[%s1 + $0x44] sm:$0xf]
        %v233 = vld [vmem:[%s1 + $0x48] sm:$0xf]
        %v234 = vld [vmem:[%s1 + $0x4c] sm:$0xf]
        %v235 = vld [vmem:[%s1 + $0x50] sm:$0xf]
        %v236 = vld [vmem:[%s1 + $0x54] sm:$0xf]
        %v237 = vld [vmem:[%s1 + $0x58] sm:$0xf]
        %v238 = vld [vmem:[%s1 + $0x5c] sm:$0xf]
        %v239 = vld [vmem:[%s1 + $0x60] sm:$0xf]
        %v240 = vld [vmem:[%s1 + $0x64] sm:$0xf]
        %v241 = vld [vmem:[%s1 + $0x68] sm:$0xf]
        %v242 = vld [vmem:[%s1 + $0x6c] sm:$0xf]
        %v243 = vld [vmem:[%s1 + $0x70] sm:$0xf]
        %v244 = vld [vmem:[%s1 + $0x74] sm:$0xf]
        %v245 = vld [vmem:[%s1 + $0x78] sm:$0xf]
        %v246 = vld [vmem:[%s1 + $0x7c] sm:$0xf]
        %v247 = vld [vmem:[%s2] sm:$0x1]
        %v249 = vlaneseq
        %v250 = vshrl.u32 %v249, 7
        %v251 = vsub.s32 0, %v250
        %v252 = vrot.slane %v247, %v251
        %v268 = vunpack.c.l.b16 %v201
        %v269 = vunpack.c.h.b16 %v201
        %v270 = vunpack.c.l.b16 %v202
        %v271 = vunpack.c.h.b16 %v202
        %v272 = vunpack.c.l.b16 %v203
        %v273 = vunpack.c.h.b16 %v203
        %v274 = vunpack.c.l.b16 %v204
        %v275 = vunpack.c.h.b16 %v204
        %v276 = vunpack.c.l.b16 %v205
        %v277 = vunpack.c.h.b16 %v205
        %v278 = vunpack.c.l.b16 %v206
        %v279 = vunpack.c.h.b16 %v206
        %v280 = vunpack.c.l.b16 %v207
        %v281 = vunpack.c.h.b16 %v207
        %v282 = vunpack.c.l.b16 %v208
        %v283 = vunpack.c.h.b16 %v208
        %v284 = vunpack.c.l.b16 %v209
        %v285 = vunpack.c.h.b16 %v209
        %v286 = vunpack.c.l.b16 %v210
        %v287 = vunpack.c.h.b16 %v210
        %v288 = vunpack.c.l.b16 %v211
        %v289 = vunpack.c.h.b16 %v211
        %v290 = vunpack.c.l.b16 %v212
        %v291 = vunpack.c.h.b16 %v212
        %v292 = vunpack.c.l.b16 %v213
        %v293 = vunpack.c.h.b16 %v213
        %v294 = vunpack.c.l.b16 %v214
        %v295 = vunpack.c.h.b16 %v214
        %v296 = vpack.c.b16 %v270, %v268
        %v297 = vpack.c.b16 %v271, %v269
        %v298 = vpack.c.b16 %v274, %v272
        %v299 = vpack.c.b16 %v275, %v273
        %v300 = vpack.c.b16 %v278, %v276
        %v301 = vpack.c.b16 %v279, %v277
        %v302 = vpack.c.b16 %v282, %v280
        %v303 = vpack.c.b16 %v283, %v281
        %v304 = vpack.c.b16 %v286, %v284
        %v305 = vpack.c.b16 %v287, %v285
        %v306 = vpack.c.b16 %v290, %v288
        %v307 = vpack.c.b16 %v291, %v289
        %v308 = vpack.c.b16 %v294, %v292
        %v309 = vpack.c.b16 %v295, %v293
        %v356 = vunpack.c.l.b16 %v215
        %v357 = vunpack.c.l.b16 %v216
        %v358 = vunpack.c.l.b16 %v217
        %v359 = vunpack.c.l.b16 %v218
        %v360 = vunpack.c.l.b16 %v219
        %v361 = vunpack.c.l.b16 %v220
        %v362 = vunpack.c.l.b16 %v221
        %v363 = vunpack.c.l.b16 %v222
        %v364 = vunpack.c.l.b16 %v223
        %v365 = vunpack.c.l.b16 %v224
        %v366 = vunpack.c.l.b16 %v225
        %v367 = vunpack.c.l.b16 %v226
        %v368 = vunpack.c.l.b16 %v227
        %v369 = vunpack.c.l.b16 %v228
        %v370 = vunpack.c.l.b16 %v229
        %v371 = vunpack.c.l.b16 %v230
        %v372 = vunpack.c.l.b16 %v231
        %v373 = vunpack.c.l.b16 %v232
        %v374 = vunpack.c.l.b16 %v233
        %v375 = vunpack.c.l.b16 %v234
        %v376 = vunpack.c.l.b16 %v235
        %v377 = vunpack.c.l.b16 %v236
        %v378 = vunpack.c.l.b16 %v237
        %v379 = vunpack.c.l.b16 %v238
        %v380 = vunpack.c.l.b16 %v239
        %v381 = vunpack.c.l.b16 %v240
        %v382 = vunpack.c.l.b16 %v241
        %v383 = vunpack.c.l.b16 %v242
        %v384 = vunpack.c.l.b16 %v243
        %v385 = vunpack.c.l.b16 %v244
        %v386 = vunpack.c.l.b16 %v245
        %v387 = vunpack.c.l.b16 %v246
        %v388 = vpack.c.b16 %v357, %v356
        %v389 = vpack.c.b16 %v359, %v358
        %v390 = vpack.c.b16 %v361, %v360
        %v391 = vpack.c.b16 %v363, %v362
        %v392 = vpack.c.b16 %v365, %v364
        %v393 = vpack.c.b16 %v367, %v366
        %v394 = vpack.c.b16 %v369, %v368
        %v395 = vpack.c.b16 %v371, %v370
        %v396 = vpack.c.b16 %v373, %v372
        %v397 = vpack.c.b16 %v375, %v374
        %v398 = vpack.c.b16 %v377, %v376
        %v399 = vpack.c.b16 %v379, %v378
        %v400 = vpack.c.b16 %v381, %v380
        %v401 = vpack.c.b16 %v383, %v382
        %v402 = vpack.c.b16 %v385, %v384
        %v403 = vpack.c.b16 %v387, %v386
        %420 = vmatprep.subr.bf16.mxu0 0
        %421 = vmatpush1.bf16.msra.mxu0 %v388
        %422 = vmatprep.subr.bf16.mxu0 0
        %423 = vmatpush1.bf16.msra.mxu0 %v389
        %424 = vmatprep.subr.bf16.mxu0 0
        %425 = vmatpush1.bf16.msra.mxu0 %v390
        %426 = vmatprep.subr.bf16.mxu0 0
        %427 = vmatpush1.bf16.msra.mxu0 %v391
        %428 = vmatprep.subr.bf16.mxu0 0
        %429 = vmatpush1.bf16.msra.mxu0 %v392
        %430 = vmatprep.subr.bf16.mxu0 0
        %431 = vmatpush1.bf16.msra.mxu0 %v393
        %432 = vmatprep.subr.bf16.mxu0 0
        %433 = vmatpush1.bf16.msra.mxu0 %v394
        %434 = vmatprep.subr.bf16.mxu0 0
        %435 = vmatpush1.bf16.msra.mxu0 %v395
        %436 = vmatprep.subr.bf16.mxu0 0
        %437 = vmatpush1.bf16.msra.mxu0 %v396
        %438 = vmatprep.subr.bf16.mxu0 0
        %439 = vmatpush1.bf16.msra.mxu0 %v397
        %440 = vmatprep.subr.bf16.mxu0 0
        %441 = vmatpush1.bf16.msra.mxu0 %v398
        %442 = vmatprep.subr.bf16.mxu0 0
        %443 = vmatpush1.bf16.msra.mxu0 %v399
        %444 = vmatprep.subr.bf16.mxu0 0
        %445 = vmatpush1.bf16.msra.mxu0 %v400
        %446 = vmatprep.subr.bf16.mxu0 0
        %447 = vmatpush1.bf16.msra.mxu0 %v401
        %448 = vmatprep.subr.bf16.mxu0 0
        %449 = vmatpush1.bf16.msra.mxu0 %v402
        %450 = vmatprep.subr.bf16.mxu0 0
        %451 = vmatpush1.bf16.msra.mxu0 %v403
        %452 = vmatprep.mubr.bf16.mxu0 %v297
        %453 = vmatmul.mubr.bf16.gmra.mrb[0].mxu0 %v296
        %v454 = vpop.f32.mrb[0].mxu0
        %v455 = vadd.f32 %v252, %v454
        %v456 = vpop.f32.mrb[0].mxu0
        %v457 = vpop.f32.mrb[0].mxu0
        %v458 = vadd.f32 %v252, %v457
        %v459 = vpop.f32.mrb[0].mxu0
        %460 = vmatprep.mubr.bf16.mxu0 %v299
        %461 = vmatmul.mubr.bf16.gmra.mrb[0].mxu0 %v298
        %v462 = vpop.f32.mrb[0].mxu0
        %v463 = vadd.f32 %v252, %v462
        %v464 = vpop.f32.mrb[0].mxu0
        %v465 = vpop.f32.mrb[0].mxu0
        %v466 = vadd.f32 %v252, %v465
        %v467 = vpop.f32.mrb[0].mxu0
        %468 = vmatprep.mubr.bf16.mxu0 %v301
        %469 = vmatmul.mubr.bf16.gmra.mrb[0].mxu0 %v300
        %v470 = vpop.f32.mrb[0].mxu0
        %v471 = vadd.f32 %v252, %v470
        %v472 = vpop.f32.mrb[0].mxu0
        %v473 = vpop.f32.mrb[0].mxu0
        %v474 = vadd.f32 %v252, %v473
        %v475 = vpop.f32.mrb[0].mxu0
        %476 = vmatprep.mubr.bf16.mxu0 %v303
        %477 = vmatmul.mubr.bf16.gmra.mrb[0].mxu0 %v302
        %v478 = vpop.f32.mrb[0].mxu0
        %v479 = vadd.f32 %v252, %v478
        %v480 = vpop.f32.mrb[0].mxu0
        %v481 = vpop.f32.mrb[0].mxu0
        %v482 = vadd.f32 %v252, %v481
        %v483 = vpop.f32.mrb[0].mxu0
        %484 = vmatprep.mubr.bf16.mxu0 %v305
        %485 = vmatmul.mubr.bf16.gmra.mrb[0].mxu0 %v304
        %v486 = vpop.f32.mrb[0].mxu0
        %v487 = vadd.f32 %v252, %v486
        %v488 = vpop.f32.mrb[0].mxu0
        %v489 = vpop.f32.mrb[0].mxu0
        %v490 = vadd.f32 %v252, %v489
        %v491 = vpop.f32.mrb[0].mxu0
        %492 = vmatprep.mubr.bf16.mxu0 %v307
        %493 = vmatmul.mubr.bf16.gmra.mrb[0].mxu0 %v306
        %v494 = vpop.f32.mrb[0].mxu0
        %v495 = vadd.f32 %v252, %v494
        %v496 = vpop.f32.mrb[0].mxu0
        %v497 = vpop.f32.mrb[0].mxu0
        %v498 = vadd.f32 %v252, %v497
        %v499 = vpop.f32.mrb[0].mxu0
        %500 = vmatprep.mubr.bf16.mxu0 %v309
        %501 = vmatmul.mubr.bf16.gmra.mrb[0].mxu0 %v308
        %v502 = vpop.f32.mrb[0].mxu0
        %v503 = vadd.f32 %v252, %v502
        %v504 = vpop.f32.mrb[0].mxu0
        %v505 = vpop.f32.mrb[0].mxu0
        %v506 = vadd.f32 %v252, %v505
        %v507 = vpop.f32.mrb[0].mxu0
        %508 = vdwg.mxu0
        %v509 = vmax.f32 %v455, 0.0
        %v510 = vmax.f32 %v458, 0.0
        %v511 = vmax.f32 %v463, 0.0
        %v512 = vmax.f32 %v466, 0.0
        %v513 = vmax.f32 %v471, 0.0
        %v514 = vmax.f32 %v474, 0.0
        %v515 = vmax.f32 %v479, 0.0
        %v516 = vmax.f32 %v482, 0.0
        %v517 = vmax.f32 %v487, 0.0
        %v518 = vmax.f32 %v490, 0.0
        %v519 = vmax.f32 %v495, 0.0
        %v520 = vmax.f32 %v498, 0.0
        %v521 = vmax.f32 %v503, 0.0
        %v522 = vmax.f32 %v506, 0.0
        %v523 = vpack.c.bf16 %v510, %v509
        %v524 = vpack.c.bf16 %v512, %v511
        %v525 = vpack.c.bf16 %v514, %v513
        %v526 = vpack.c.bf16 %v516, %v515
        %v527 = vpack.c.bf16 %v518, %v517
        %v528 = vpack.c.bf16 %v520, %v519
        %v529 = vpack.c.bf16 %v522, %v521
        %v537 = vunpack.c.l.b16 %v523
        %v538 = vunpack.c.h.b16 %v523
        %v539 = vunpack.c.l.b16 %v524
        %v540 = vunpack.c.h.b16 %v524
        %v541 = vunpack.c.l.b16 %v525
        %v542 = vunpack.c.h.b16 %v525
        %v543 = vunpack.c.l.b16 %v526
        %v544 = vunpack.c.h.b16 %v526
        %v545 = vunpack.c.l.b16 %v527
        %v546 = vunpack.c.h.b16 %v527
        %v547 = vunpack.c.l.b16 %v528
        %v548 = vunpack.c.h.b16 %v528
        %v549 = vunpack.c.l.b16 %v529
        %v550 = vunpack.c.h.b16 %v529
        %v551 = vpack.c.b16 %v537, %v537
        %v552 = vpack.c.b16 %v538, %v538
        %v553 = vpack.c.b16 %v539, %v539
        %v554 = vpack.c.b16 %v540, %v540
        %v555 = vpack.c.b16 %v541, %v541
        %v556 = vpack.c.b16 %v542, %v542
        %v557 = vpack.c.b16 %v543, %v543
        %v558 = vpack.c.b16 %v544, %v544
        %v559 = vpack.c.b16 %v545, %v545
        %v560 = vpack.c.b16 %v546, %v546
        %v561 = vpack.c.b16 %v547, %v547
        %v562 = vpack.c.b16 %v548, %v548
        %v563 = vpack.c.b16 %v549, %v549
        %v564 = vpack.c.b16 %v550, %v550
        %579 = vst [vmem:[%s177] sm:$0xf] %v551
        %580 = vst [vmem:[%s177 + $0x4] sm:$0xf] %v552
        %581 = vst [vmem:[%s177 + $0x8] sm:$0xf] %v553
        %582 = vst [vmem:[%s177 + $0xc] sm:$0xf] %v554
        %583 = vst [vmem:[%s177 + $0x10] sm:$0xf] %v555
        %584 = vst [vmem:[%s177 + $0x14] sm:$0xf] %v556
        %585 = vst [vmem:[%s177 + $0x18] sm:$0xf] %v557
        %586 = vst [vmem:[%s177 + $0x1c] sm:$0xf] %v558
        %587 = vst [vmem:[%s177 + $0x20] sm:$0xf] %v559
        %588 = vst [vmem:[%s177 + $0x24] sm:$0xf] %v560
        %589 = vst [vmem:[%s177 + $0x28] sm:$0xf] %v561
        %590 = vst [vmem:[%s177 + $0x2c] sm:$0xf] %v562
        %591 = vst [vmem:[%s177 + $0x30] sm:$0xf] %v563
        %592 = vst [vmem:[%s177 + $0x34] sm:$0xf] %v564
        %s593 = sand.u32 %s90, 1
        %s594 = sand.u32 %s90, 1
        %s595 = smul.addr %s594, 56
        %s596 = scalar_lea.vmem [#allocation2], %s595
        // Predicated region
        $region33: #{net_forward.4} parent=31 // pred_check
          %p597 = pneg %p100
        $region34: #{net_forward.4} parent=31 // pred_check_branch
          %599 = sbr.rel (%p597) target = $region36
        $region35: #{net_forward.4} parent=31 // pred_region
          %s600 = smul.u32 14, %s14
          %s601 = ssub.s32 25, %s600
          %p602 = scmp.lt.s32.totalorder %s601, 14
          %s603 = scalar_select %p602, %s601, 14
          %s604 = smul.u32 64, %s603
          %p605 = scmp.ne.s32.totalorder 0, %s604
          %s606 = smul.addr %s600, 4
          %s607 = scalar_lea.vmem %s3, %s606
          // Predicated region
          $region37: #{net_forward.4} parent=35 // pred_check
            %p608 = pneg %p605
          $region38: #{net_forward.4} parent=35 // pred_check_branch
            %610 = sbr.rel (%p608) target = $region40
          $region39: #{net_forward.4} parent=35 // pred_region
            // Predicated region
            $region41: #{net_forward.4} parent=39 // pred_check
              _
            $region42: #{net_forward.4} parent=39 // pred_check_branch
              %612 = sbr.rel target = $region44
            $region43: #{net_forward.4} parent=39 // pred_region
              // Predicated region
              $region63: #{net_forward.4} parent=43 // pred_check
                _
              $region64: #{net_forward.4} parent=43 // pred_check_branch
                %688 = sbr.rel (0) target = $region66
              $region65: #{net_forward.4} parent=43 // pred_region
                %s690 = sdiv.u32.pop %s603, 14
                %s691 = srem.u32.pop %s603, 14
                // While loop
                $region67: #{net_forward.4} parent=65 // loop_pre_header
                  _
                $region68: #{net_forward.4} parent=65 // loop_header
                  %s693 = sphi 0, %s695
                  %p694 = scmp.ge.s32.totalorder %s693, %s690
                  %s698 = sphi 0, %s731
                  %s699 = sphi %s596, %s734
                  %s700 = sphi %s607, %s735
                $region69: #{net_forward.4} parent=65 // loop_header_branch
                  %697 = sbr.rel (%p694) target = $region73
                $region70: #{net_forward.4} parent=65 // loop_body
                  %v701 = vld [vmem:[%s699] sm:$0xf]
                  %702 = vst [vmem:[%s700] sm:$0xf] %v701
                  %v703 = vld [vmem:[%s699 + $0x4] sm:$0xf]
                  %704 = vst [vmem:[%s700 + $0x4] sm:$0xf] %v703
                  %v705 = vld [vmem:[%s699 + $0x8] sm:$0xf]
                  %706 = vst [vmem:[%s700 + $0x8] sm:$0xf] %v705
                  %v707 = vld [vmem:[%s699 + $0xc] sm:$0xf]
                  %708 = vst [vmem:[%s700 + $0xc] sm:$0xf] %v707
                  %v709 = vld [vmem:[%s699 + $0x10] sm:$0xf]
                  %710 = vst [vmem:[%s700 + $0x10] sm:$0xf] %v709
                  %v711 = vld [vmem:[%s699 + $0x14] sm:$0xf]
                  %712 = vst [vmem:[%s700 + $0x14] sm:$0xf] %v711
                  %v713 = vld [vmem:[%s699 + $0x18] sm:$0xf]
                  %714 = vst [vmem:[%s700 + $0x18] sm:$0xf] %v713
                  %v715 = vld [vmem:[%s699 + $0x1c] sm:$0xf]
                  %716 = vst [vmem:[%s700 + $0x1c] sm:$0xf] %v715
                  %v717 = vld [vmem:[%s699 + $0x20] sm:$0xf]
                  %718 = vst [vmem:[%s700 + $0x20] sm:$0xf] %v717
                  %v719 = vld [vmem:[%s699 + $0x24] sm:$0xf]
                  %720 = vst [vmem:[%s700 + $0x24] sm:$0xf] %v719
                  %v721 = vld [vmem:[%s699 + $0x28] sm:$0xf]
                  %722 = vst [vmem:[%s700 + $0x28] sm:$0xf] %v721
                  %v723 = vld [vmem:[%s699 + $0x2c] sm:$0xf]
                  %724 = vst [vmem:[%s700 + $0x2c] sm:$0xf] %v723
                  %v725 = vld [vmem:[%s699 + $0x30] sm:$0xf]
                  %726 = vst [vmem:[%s700 + $0x30] sm:$0xf] %v725
                  %v727 = vld [vmem:[%s699 + $0x34] sm:$0xf]
                  %728 = vst [vmem:[%s700 + $0x34] sm:$0xf] %v727
                  %s729 = sadd.s32 1, %s698
                  %p730 = scmp.ge.s32.totalorder %s729, %s690
                  %s731 = scalar_select %p730, 0, %s729
                  %s732 = smul.u32 %s731, 56
                  %s733 = smul.u32 %s731, 56
                  %s734 = scalar_lea.vmem %s596, %s732 [#allocation2]
                  %s735 = scalar_lea.vmem %s607, %s733
                $region71: #{net_forward.4} parent=65 // loop_footer
                  %s695 = sadd.s32 %s693, 1
                $region72: #{net_forward.4} parent=65 // loop_footer_branch
                  %692 = sbr.rel target = $region68
                $region73: #{net_forward.4} parent=65 // loop_exit
                  _
                %s736 = sdiv.u32.pop %s603, 14
                %s737 = srem.u32.pop %s603, 14
                %s738 = smul.u32 %s736, 14
                %s739 = smul.u32 4, %s738
                %s740 = scalar_lea.vmem %s596, %s739 [#allocation2]
                %s741 = smul.u32 4, %s738
                %s742 = scalar_lea.vmem %s607, %s741
                // While loop
                $region74: #{net_forward.4} parent=65 // loop_pre_header
                  _
                $region75: #{net_forward.4} parent=65 // loop_header
                  %s744 = sphi 0, %s746
                  %p745 = scmp.ge.s32.totalorder %s744, %s737
                  %s749 = sphi 0, %s756
                  %s750 = sphi %s740, %s759
                  %s751 = sphi %s742, %s760
                $region76: #{net_forward.4} parent=65 // loop_header_branch
                  %748 = sbr.rel (%p745) target = $region80
                $region77: #{net_forward.4} parent=65 // loop_body
                  %v752 = vld [vmem:[%s750] sm:$0xf]
                  %753 = vst [vmem:[%s751] sm:$0xf] %v752
                  %s754 = sadd.s32 1, %s749
                  %p755 = scmp.ge.s32.totalorder %s754, %s737
                  %s756 = scalar_select %p755, 0, %s754
                  %s757 = smul.u32 %s756, 4
                  %s758 = smul.u32 %s756, 4
                  %s759 = scalar_lea.vmem %s740, %s757 [#allocation2]
                  %s760 = scalar_lea.vmem %s742, %s758
                $region78: #{net_forward.4} parent=65 // loop_footer
                  %s746 = sadd.s32 %s744, 1
                $region79: #{net_forward.4} parent=65 // loop_footer_branch
                  %743 = sbr.rel target = $region75
                $region80: #{net_forward.4} parent=65 // loop_exit
                  _
              $region66: #{net_forward.4} parent=43 // pred_fallthru
                _
            $region44: #{net_forward.4} parent=39 // pred_fallthru
              _
            // Predicated region
            $region45: #{net_forward.4} parent=39 // pred_check
              _
            $region46: #{net_forward.4} parent=39 // pred_check_branch
              %614 = sbr.rel (0) target = $region48
            $region47: #{net_forward.4} parent=39 // pred_region
              %s616 = sdiv.u32.pop %s603, 14
              %s617 = srem.u32.pop %s603, 14
              // While loop
              $region49: #{net_forward.4} parent=47 // loop_pre_header
                _
              $region50: #{net_forward.4} parent=47 // loop_header
                %s619 = sphi 0, %s621
                %p620 = scmp.ge.s32.totalorder %s619, %s616
                %s624 = sphi 0, %s657
                %s625 = sphi %s596, %s660
                %s626 = sphi %s607, %s661
              $region51: #{net_forward.4} parent=47 // loop_header_branch
                %623 = sbr.rel (%p620) target = $region55
              $region52: #{net_forward.4} parent=47 // loop_body
                %v627 = vld [vmem:[%s625] sm:$0xf]
                %628 = vst [vmem:[%s626] sm:$0xf] %v627
                %v629 = vld [vmem:[%s625 + $0x4] sm:$0xf]
                %630 = vst [vmem:[%s626 + $0x4] sm:$0xf] %v629
                %v631 = vld [vmem:[%s625 + $0x8] sm:$0xf]
                %632 = vst [vmem:[%s626 + $0x8] sm:$0xf] %v631
                %v633 = vld [vmem:[%s625 + $0xc] sm:$0xf]
                %634 = vst [vmem:[%s626 + $0xc] sm:$0xf] %v633
                %v635 = vld [vmem:[%s625 + $0x10] sm:$0xf]
                %636 = vst [vmem:[%s626 + $0x10] sm:$0xf] %v635
                %v637 = vld [vmem:[%s625 + $0x14] sm:$0xf]
                %638 = vst [vmem:[%s626 + $0x14] sm:$0xf] %v637
                %v639 = vld [vmem:[%s625 + $0x18] sm:$0xf]
                %640 = vst [vmem:[%s626 + $0x18] sm:$0xf] %v639
                %v641 = vld [vmem:[%s625 + $0x1c] sm:$0xf]
                %642 = vst [vmem:[%s626 + $0x1c] sm:$0xf] %v641
                %v643 = vld [vmem:[%s625 + $0x20] sm:$0xf]
                %644 = vst [vmem:[%s626 + $0x20] sm:$0xf] %v643
                %v645 = vld [vmem:[%s625 + $0x24] sm:$0xf]
                %646 = vst [vmem:[%s626 + $0x24] sm:$0xf] %v645
                %v647 = vld [vmem:[%s625 + $0x28] sm:$0xf]
                %648 = vst [vmem:[%s626 + $0x28] sm:$0xf] %v647
                %v649 = vld [vmem:[%s625 + $0x2c] sm:$0xf]
                %650 = vst [vmem:[%s626 + $0x2c] sm:$0xf] %v649
                %v651 = vld [vmem:[%s625 + $0x30] sm:$0xf]
                %652 = vst [vmem:[%s626 + $0x30] sm:$0xf] %v651
                %v653 = vld [vmem:[%s625 + $0x34] sm:$0xf]
                %654 = vst [vmem:[%s626 + $0x34] sm:$0xf] %v653
                %s655 = sadd.s32 1, %s624
                %p656 = scmp.ge.s32.totalorder %s655, %s616
                %s657 = scalar_select %p656, 0, %s655
                %s658 = smul.u32 %s657, 56
                %s659 = smul.u32 %s657, 56
                %s660 = scalar_lea.vmem %s596, %s658 [#allocation2]
                %s661 = scalar_lea.vmem %s607, %s659
              $region53: #{net_forward.4} parent=47 // loop_footer
                %s621 = sadd.s32 %s619, 1
              $region54: #{net_forward.4} parent=47 // loop_footer_branch
                %618 = sbr.rel target = $region50
              $region55: #{net_forward.4} parent=47 // loop_exit
                _
              %s662 = sdiv.u32.pop %s603, 14
              %s663 = srem.u32.pop %s603, 14
              %s664 = smul.u32 %s662, 14
              %s665 = smul.u32 4, %s664
              %s666 = scalar_lea.vmem %s596, %s665 [#allocation2]
              %s667 = smul.u32 4, %s664
              %s668 = scalar_lea.vmem %s607, %s667
              // While loop
              $region56: #{net_forward.4} parent=47 // loop_pre_header
                _
              $region57: #{net_forward.4} parent=47 // loop_header
                %s670 = sphi 0, %s672
                %p671 = scmp.ge.s32.totalorder %s670, %s663
                %s675 = sphi 0, %s682
                %s676 = sphi %s666, %s685
                %s677 = sphi %s668, %s686
              $region58: #{net_forward.4} parent=47 // loop_header_branch
                %674 = sbr.rel (%p671) target = $region62
              $region59: #{net_forward.4} parent=47 // loop_body
                %v678 = vld [vmem:[%s676] sm:$0xf]
                %679 = vst [vmem:[%s677] sm:$0xf] %v678
                %s680 = sadd.s32 1, %s675
                %p681 = scmp.ge.s32.totalorder %s680, %s663
                %s682 = scalar_select %p681, 0, %s680
                %s683 = smul.u32 %s682, 4
                %s684 = smul.u32 %s682, 4
                %s685 = scalar_lea.vmem %s666, %s683 [#allocation2]
                %s686 = scalar_lea.vmem %s668, %s684
              $region60: #{net_forward.4} parent=47 // loop_footer
                %s672 = sadd.s32 %s670, 1
              $region61: #{net_forward.4} parent=47 // loop_footer_branch
                %669 = sbr.rel target = $region57
              $region62: #{net_forward.4} parent=47 // loop_exit
                _
            $region48: #{net_forward.4} parent=39 // pred_fallthru
              _
          $region40: #{net_forward.4} parent=35 // pred_fallthru
            _
          %761 = vnop
        $region36: #{net_forward.4} parent=31 // pred_fallthru
          _
      $region32: #{net_forward.4} parent=5 // pred_fallthru
        _
      %p762 = scmp.le.s32.totalorder 2, %s9
      // Predicated region
      $region81: #{net_forward.4} parent=5 // pred_check
        %p763 = pneg %p762
      $region82: #{net_forward.4} parent=5 // pred_check_branch
        %765 = sbr.rel (%p763) target = $region84
      $region83: #{net_forward.4} parent=5 // pred_region
        %s766 = ssub.s32 %s9, 2
        // Predicated region
        $region85: #{net_forward.4} parent=83 // pred_check
          %p767 = pneg %p106
        $region86: #{net_forward.4} parent=83 // pred_check_branch
          %769 = sbr.rel (%p767) target = $region88
        $region87: #{net_forward.4} parent=83 // pred_region
          %s770 = sand.u32 %s91, 1
          %s771 = sand.u32 %s91, 1
          %s772 = smul.addr %s771, 56
          %s773 = scalar_lea.vmem [#allocation2], %s772
        $region88: #{net_forward.4} parent=83 // pred_fallthru
          _
      $region84: #{net_forward.4} parent=5 // pred_fallthru
        _
    $region6: #{net_forward.4} parent=1 // loop_footer
      %s13 = sadd.s32 1, %s9
    $region7: #{net_forward.4} parent=1 // loop_footer_branch
      %8 = sbr.rel target = $region3
    $region8: #{net_forward.4} parent=1 // loop_exit
      _

// kernel: net_forward.5
$region0: #{net_forward.5}
  #allocation0 [shape = 'u32[]', space=smem, size = 0x4, offset = 0x4, fixed_abs, tag = 'smem constant byte address 0x4 - core index']
  #allocation1 [shape = 'u32[144,128]{1,0:T(1,128)}', space=vmem, size = 0x12000, scoped, tag = 'internal scratch']
  %s0 = inlined_call_operand.vmem [shape: bf16[2,400], index: 0, kind: input, shape index: {}]
  %s1 = inlined_call_operand.vmem [shape: bf16[400,128], index: 1, kind: input, shape index: {}]
  %s2 = inlined_call_operand.vmem [shape: f32[1,128], index: 2, kind: input, shape index: {}]
  %s3 = inlined_call_operand.vmem [shape: bf16[128,128], index: 3, kind: input, shape index: {}]
  %s4 = inlined_call_operand.vmem [shape: f32[1,128], index: 4, kind: input, shape index: {}]
  %s5 = inlined_call_operand.vmem [shape: bf16[128,128], index: 5, kind: input, shape index: {}]
  %s6 = inlined_call_operand.vmem [shape: f32[1,128], index: 6, kind: input, shape index: {}]
  %s7 = inlined_call_operand.hbm [shape: f32[2,128], index: 7, kind: output, shape index: {}]
  %s8 = sld [smem:[#allocation0]]
  $region38: #{net_forward.5} parent=0
    _
  %s10 = ssub.s32 1, %s8
  %s11 = scalar_select 0, %s10, %s8
  $region1: #{net_forward.5} parent=0
    #allocation2 [shape = 'u8[1024]{0}', space=vmem, size = 0x400, scoped, tag = 'output window, operand 0, single buffered']
    #allocation3 [shape = 's32[1]{0}', space=sflag, size = 0x4, scoped, tag = 'scoped memory for net_forward.5']
    %12 = vsyncpa [#allocation3], 0
    // Predicated region
    $region2: #{net_forward.5} parent=1 // pred_check
      _
    $region3: #{net_forward.5} parent=1 // pred_check_branch
      %14 = sbr.rel (0) target = $region5
    $region4: #{net_forward.5} parent=1 // pred_region
      _
    $region5: #{net_forward.5} parent=1 // pred_fallthru
      _
    // Predicated region
    $region6: #{net_forward.5} parent=1 // pred_check
      _
    $region7: #{net_forward.5} parent=1 // pred_check_branch
      %16 = sbr.rel (0) target = $region9
    $region8: #{net_forward.5} parent=1 // pred_region
      _
    $region9: #{net_forward.5} parent=1 // pred_fallthru
      _
    // Predicated region
    $region10: #{net_forward.5} parent=1 // pred_check
      _
    $region11: #{net_forward.5} parent=1 // pred_check_branch
      %18 = sbr.rel (0) target = $region13
    $region12: #{net_forward.5} parent=1 // pred_region
      _
    $region13: #{net_forward.5} parent=1 // pred_fallthru
      _
    // Predicated region
    $region14: #{net_forward.5} parent=1 // pred_check
      _
    $region15: #{net_forward.5} parent=1 // pred_check_branch
      %20 = sbr.rel (0) target = $region17
    $region16: #{net_forward.5} parent=1 // pred_region
      _
    $region17: #{net_forward.5} parent=1 // pred_fallthru
      _
    // Predicated region
    $region18: #{net_forward.5} parent=1 // pred_check
      _
    $region19: #{net_forward.5} parent=1 // pred_check_branch
      %22 = sbr.rel (0) target = $region21
    $region20: #{net_forward.5} parent=1 // pred_region
      _
    $region21: #{net_forward.5} parent=1 // pred_fallthru
      _
    // Predicated region
    $region22: #{net_forward.5} parent=1 // pred_check
      _
    $region23: #{net_forward.5} parent=1 // pred_check_branch
      %24 = sbr.rel (0) target = $region25
    $region24: #{net_forward.5} parent=1 // pred_region
      _
    $region25: #{net_forward.5} parent=1 // pred_fallthru
      _
    // Predicated region
    $region26: #{net_forward.5} parent=1 // pred_check
      _
    $region27: #{net_forward.5} parent=1 // pred_check_branch
      %26 = sbr.rel (0) target = $region29
    $region28: #{net_forward.5} parent=1 // pred_region
      _
    $region29: #{net_forward.5} parent=1 // pred_fallthru
      _
    %v28 = vld [vmem:[%s0] sm:$0xf]
    %v29 = vld [vmem:[%s1] sm:$0xf]
    %v30 = vld [vmem:[%s1 + $0x4] sm:$0xf]
    %v31 = vld [vmem:[%s1 + $0x8] sm:$0xf]
    %v32 = vld [vmem:[%s1 + $0xc] sm:$0xf]
    %v33 = vld [vmem:[%s1 + $0x10] sm:$0xf]
    %v34 = vld [vmem:[%s1 + $0x14] sm:$0xf]
    %v35 = vld [vmem:[%s1 + $0x18] sm:$0xf]
    %v36 = vld [vmem:[%s1 + $0x1c] sm:$0xf]
    %v37 = vld [vmem:[%s1 + $0x20] sm:$0xf]
    %v38 = vld [vmem:[%s1 + $0x24] sm:$0xf]
    %v39 = vld [vmem:[%s1 + $0x28] sm:$0xf]
    %v40 = vld [vmem:[%s1 + $0x2c] sm:$0xf]
    %v41 = vld [vmem:[%s1 + $0x30] sm:$0xf]
    %v42 = vld [vmem:[%s1 + $0x34] sm:$0xf]
    %v43 = vld [vmem:[%s1 + $0x38] sm:$0xf]
    %v44 = vld [vmem:[%s1 + $0x3c] sm:$0xf]
    %v45 = vld [vmem:[%s1 + $0x40] sm:$0xf]
    %v46 = vld [vmem:[%s1 + $0x44] sm:$0xf]
    %v47 = vld [vmem:[%s1 + $0x48] sm:$0xf]
    %v48 = vld [vmem:[%s1 + $0x4c] sm:$0xf]
    %v49 = vld [vmem:[%s1 + $0x50] sm:$0xf]
    %v50 = vld [vmem:[%s1 + $0x54] sm:$0xf]
    %v51 = vld [vmem:[%s1 + $0x58] sm:$0xf]
    %v52 = vld [vmem:[%s1 + $0x5c] sm:$0xf]
    %v53 = vld [vmem:[%s1 + $0x60] sm:$0xf]
    %v54 = vld [vmem:[%s1 + $0x64] sm:$0xf]
    %v55 = vld [vmem:[%s1 + $0x68] sm:$0xf]
    %v56 = vld [vmem:[%s1 + $0x6c] sm:$0xf]
    %v57 = vld [vmem:[%s1 + $0x70] sm:$0xf]
    %v58 = vld [vmem:[%s1 + $0x74] sm:$0xf]
    %v59 = vld [vmem:[%s1 + $0x78] sm:$0xf]
    %v60 = vld [vmem:[%s1 + $0x7c] sm:$0xf]
    %v61 = vld [vmem:[%s1 + $0x80] sm:$0xf]
    %v62 = vld [vmem:[%s1 + $0x84] sm:$0xf]
    %v63 = vld [vmem:[%s1 + $0x88] sm:$0xf]
    %v64 = vld [vmem:[%s1 + $0x8c] sm:$0xf]
    %v65 = vld [vmem:[%s1 + $0x90] sm:$0xf]
    %v66 = vld [vmem:[%s1 + $0x94] sm:$0xf]
    %v67 = vld [vmem:[%s1 + $0x98] sm:$0xf]
    %v68 = vld [vmem:[%s1 + $0x9c] sm:$0xf]
    %v69 = vld [vmem:[%s1 + $0xa0] sm:$0xf]
    %v70 = vld [vmem:[%s1 + $0xa4] sm:$0xf]
    %v71 = vld [vmem:[%s1 + $0xa8] sm:$0xf]
    %v72 = vld [vmem:[%s1 + $0xac] sm:$0xf]
    %v73 = vld [vmem:[%s1 + $0xb0] sm:$0xf]
    %v74 = vld [vmem:[%s1 + $0xb4] sm:$0xf]
    %v75 = vld [vmem:[%s1 + $0xb8] sm:$0xf]
    %v76 = vld [vmem:[%s1 + $0xbc] sm:$0xf]
    %v77 = vld [vmem:[%s1 + $0xc0] sm:$0xf]
    %v78 = vld [vmem:[%s1 + $0xc4] sm:$0xf]
    %v79 = vld [vmem:[%s2] sm:$0x1]
    %v81 = vlaneseq
    %v82 = vshrl.u32 %v81, 7
    %v83 = vsub.s32 0, %v82
    %v84 = vrot.slane %v79, %v83
    %v88 = vunpack.c.l.s4 1966171168
    %v89 = vunpack.c.0.s8 %v88
    %v90 = vlaneseq
    %v91 = vshrl.u32 %v90, 7
    %v92 = vsub.s32 %v89, %v91
    %v93 = vrot.slane %v28, %v92
    %v94 = vcombine.high %v93, %v93
    %v96 = vunpack.c.l.s4 1966171168
    %v97 = vunpack.c.0.s8 %v96
    %v98 = vlaneseq
    %v99 = vshrl.u32 %v98, 7
    %v100 = vsub.s32 %v97, %v99
    %v101 = vrot.slane %v93, %v100
    %v103 = vunpack.c.l.s4 1966171168
    %v104 = vunpack.c.0.s8 %v103
    %v105 = vlaneseq
    %v106 = vshrl.u32 %v105, 7
    %v107 = vsub.s32 %v104, %v106
    %v108 = vrot.slane %v94, %v107
    %v109 = vcombine.high %v101, %v101
    %v110 = vcombine.high %v108, %v108
    %v164 = vunpack.c.l.b16 %v29
    %v165 = vunpack.c.l.b16 %v30
    %v166 = vunpack.c.l.b16 %v31
    %v167 = vunpack.c.l.b16 %v32
    %v168 = vunpack.c.l.b16 %v33
    %v169 = vunpack.c.l.b16 %v34
    %v170 = vunpack.c.l.b16 %v35
    %v171 = vunpack.c.l.b16 %v36
    %v172 = vunpack.c.l.b16 %v37
    %v173 = vunpack.c.l.b16 %v38
    %v174 = vunpack.c.l.b16 %v39
    %v175 = vunpack.c.l.b16 %v40
    %v176 = vunpack.c.l.b16 %v41
    %v177 = vunpack.c.l.b16 %v42
    %v178 = vunpack.c.l.b16 %v43
    %v179 = vunpack.c.l.b16 %v44
    %v180 = vunpack.c.l.b16 %v45
    %v181 = vunpack.c.l.b16 %v46
    %v182 = vunpack.c.l.b16 %v47
    %v183 = vunpack.c.l.b16 %v48
    %v184 = vunpack.c.l.b16 %v49
    %v185 = vunpack.c.l.b16 %v50
    %v186 = vunpack.c.l.b16 %v51
    %v187 = vunpack.c.l.b16 %v52
    %v188 = vunpack.c.l.b16 %v53
    %v189 = vunpack.c.l.b16 %v54
    %v190 = vunpack.c.l.b16 %v55
    %v191 = vunpack.c.l.b16 %v56
    %v192 = vunpack.c.l.b16 %v57
    %v193 = vunpack.c.l.b16 %v58
    %v194 = vunpack.c.l.b16 %v59
    %v195 = vunpack.c.l.b16 %v60
    %v196 = vunpack.c.l.b16 %v61
    %v197 = vunpack.c.l.b16 %v62
    %v198 = vunpack.c.l.b16 %v63
    %v199 = vunpack.c.l.b16 %v64
    %v200 = vunpack.c.l.b16 %v65
    %v201 = vunpack.c.l.b16 %v66
    %v202 = vunpack.c.l.b16 %v67
    %v203 = vunpack.c.l.b16 %v68
    %v204 = vunpack.c.l.b16 %v69
    %v205 = vunpack.c.l.b16 %v70
    %v206 = vunpack.c.l.b16 %v71
    %v207 = vunpack.c.l.b16 %v72
    %v208 = vunpack.c.l.b16 %v73
    %v209 = vunpack.c.l.b16 %v74
    %v210 = vunpack.c.l.b16 %v75
    %v211 = vunpack.c.l.b16 %v76
    %v212 = vunpack.c.l.b16 %v77
    %v213 = vunpack.c.l.b16 %v78
    %v214 = vpack.c.b16 %v165, %v164
    %v215 = vpack.c.b16 %v167, %v166
    %v216 = vpack.c.b16 %v169, %v168
    %v217 = vpack.c.b16 %v171, %v170
    %v218 = vpack.c.b16 %v173, %v172
    %v219 = vpack.c.b16 %v175, %v174
    %v220 = vpack.c.b16 %v177, %v176
    %v221 = vpack.c.b16 %v179, %v178
    %v222 = vpack.c.b16 %v181, %v180
    %v223 = vpack.c.b16 %v183, %v182
    %v224 = vpack.c.b16 %v185, %v184
    %v225 = vpack.c.b16 %v187, %v186
    %v226 = vpack.c.b16 %v189, %v188
    %v227 = vpack.c.b16 %v191, %v190
    %v228 = vpack.c.b16 %v193, %v192
    %v229 = vpack.c.b16 %v195, %v194
    %v230 = vpack.c.b16 %v197, %v196
    %v231 = vpack.c.b16 %v199, %v198
    %v232 = vpack.c.b16 %v201, %v200
    %v233 = vpack.c.b16 %v203, %v202
    %v234 = vpack.c.b16 %v205, %v204
    %v235 = vpack.c.b16 %v207, %v206
    %v236 = vpack.c.b16 %v209, %v208
    %v237 = vpack.c.b16 %v211, %v210
    %v238 = vpack.c.b16 %v213, %v212
    %vm264 = vcmask 130048
    %v266 = vsel %vm264, %v110, 0
    %268 = vmatprep.subr.bf16.mxu0 0
    %269 = vmatpush1.bf16.msra.mxu0 %v214
    %270 = vmatprep.subr.bf16.mxu0 0
    %271 = vmatpush1.bf16.msra.mxu0 %v215
    %272 = vmatprep.subr.bf16.mxu0 0
    %273 = vmatpush1.bf16.msra.mxu0 %v216
    %274 = vmatprep.subr.bf16.mxu0 0
    %275 = vmatpush1.bf16.msra.mxu0 %v217
    %276 = vmatprep.subr.bf16.mxu0 0
    %277 = vmatpush1.bf16.msra.mxu0 %v218
    %278 = vmatprep.subr.bf16.mxu0 0
    %279 = vmatpush1.bf16.msra.mxu0 %v219
    %280 = vmatprep.subr.bf16.mxu0 0
    %281 = vmatpush1.bf16.msra.mxu0 %v220
    %282 = vmatprep.subr.bf16.mxu0 0
    %283 = vmatpush1.bf16.msra.mxu0 %v221
    %284 = vmatprep.subr.bf16.mxu0 0
    %285 = vmatpush1.bf16.msra.mxu0 %v222
    %286 = vmatprep.subr.bf16.mxu0 0
    %287 = vmatpush1.bf16.msra.mxu0 %v223
    %288 = vmatprep.subr.bf16.mxu0 0
    %289 = vmatpush1.bf16.msra.mxu0 %v224
    %290 = vmatprep.subr.bf16.mxu0 0
    %291 = vmatpush1.bf16.msra.mxu0 %v225
    %292 = vmatprep.subr.bf16.mxu0 0
    %293 = vmatpush1.bf16.msra.mxu0 %v226
    %294 = vmatprep.subr.bf16.mxu0 0
    %295 = vmatpush1.bf16.msra.mxu0 %v227
    %296 = vmatprep.subr.bf16.mxu0 0
    %297 = vmatpush1.bf16.msra.mxu0 %v228
    %298 = vmatprep.subr.bf16.mxu0 0
    %299 = vmatpush1.bf16.msra.mxu0 %v229
    %300 = vmatprep.mubr.bf16.mxu0 %v108
    %301 = vmatmul.mubr.bf16.gmra.mrb[0].mxu0 %v101
    %v302 = vpop.f32.mrb[0].mxu0
    %v303 = vadd.f32 %v84, %v302
    %v304 = vpop.f32.mrb[0].mxu0
    %v305 = vpop.f32.mrb[0].mxu0
    %v306 = vpop.f32.mrb[0].mxu0
    %307 = vdwg.mxu0
    %308 = vmatprep.subr.bf16.mxu0 0
    %309 = vmatpush1.bf16.msra.mxu0 %v230
    %310 = vmatprep.subr.bf16.mxu0 0
    %311 = vmatpush1.bf16.msra.mxu0 %v231
    %312 = vmatprep.subr.bf16.mxu0 0
    %313 = vmatpush1.bf16.msra.mxu0 %v232
    %314 = vmatprep.subr.bf16.mxu0 0
    %315 = vmatpush1.bf16.msra.mxu0 %v233
    %316 = vmatprep.subr.bf16.mxu0 0
    %317 = vmatpush1.bf16.msra.mxu0 %v234
    %318 = vmatprep.subr.bf16.mxu0 0
    %319 = vmatpush1.bf16.msra.mxu0 %v235
    %320 = vmatprep.subr.bf16.mxu0 0
    %321 = vmatpush1.bf16.msra.mxu0 %v236
    %322 = vmatprep.subr.bf16.mxu0 0
    %323 = vmatpush1.bf16.msra.mxu0 %v237
    %324 = vmatprep.subr.bf16.mxu0 0
    %325 = vmatpush1.bf16.msra.mxu0 %v238
    %326 = vmatprep.subr.bf16.mxu0 0
    %327 = vmatpush1.bf16.msra.mxu0 0
    %328 = vmatprep.subr.bf16.mxu0 0
    %329 = vmatpush1.bf16.msra.mxu0 0
    %330 = vmatprep.subr.bf16.mxu0 0
    %331 = vmatpush1.bf16.msra.mxu0 0
    %332 = vmatprep.subr.bf16.mxu0 0
    %333 = vmatpush1.bf16.msra.mxu0 0
    %334 = vmatprep.subr.bf16.mxu0 0
    %335 = vmatpush1.bf16.msra.mxu0 0
    %336 = vmatprep.subr.bf16.mxu0 0
    %337 = vmatpush1.bf16.msra.mxu0 0
    %338 = vmatprep.subr.bf16.mxu0 0
    %339 = vmatpush1.bf16.msra.mxu0 0
    %340 = vmatprep.mubr.bf16.mxu0 %v266
    %341 = vmatmul.mubr.bf16.gmra.mrb[0].mxu0 %v109
    %v342 = vpop.f32.mrb[0].mxu0
    %v343 = vadd.f32 %v303, %v342
    %v344 = vpop.f32.mrb[0].mxu0
    %v345 = vpop.f32.mrb[0].mxu0
    %v346 = vpop.f32.mrb[0].mxu0
    %347 = vdwg.mxu0
    %v348 = vmax.f32 %v343, 0.0
    %v349 = vpack.c.bf16 %v348, %v348
    %v350 = vld [vmem:[%s3] sm:$0xf]
    %v351 = vld [vmem:[%s3 + $0x4] sm:$0xf]
    %v352 = vld [vmem:[%s3 + $0x8] sm:$0xf]
    %v353 = vld [vmem:[%s3 + $0xc] sm:$0xf]
    %v354 = vld [vmem:[%s3 + $0x10] sm:$0xf]
    %v355 = vld [vmem:[%s3 + $0x14] sm:$0xf]
    %v356 = vld [vmem:[%s3 + $0x18] sm:$0xf]
    %v357 = vld [vmem:[%s3 + $0x1c] sm:$0xf]
    %v358 = vld [vmem:[%s3 + $0x20] sm:$0xf]
    %v359 = vld [vmem:[%s3 + $0x24] sm:$0xf]
    %v360 = vld [vmem:[%s3 + $0x28] sm:$0xf]
    %v361 = vld [vmem:[%s3 + $0x2c] sm:$0xf]
    %v362 = vld [vmem:[%s3 + $0x30] sm:$0xf]
    %v363 = vld [vmem:[%s3 + $0x34] sm:$0xf]
    %v364 = vld [vmem:[%s3 + $0x38] sm:$0xf]
    %v365 = vld [vmem:[%s3 + $0x3c] sm:$0xf]
    %v366 = vld [vmem:[%s4] sm:$0x1]
    %v368 = vlaneseq
    %v369 = vshrl.u32 %v368, 7
    %v370 = vsub.s32 0, %v369
    %v371 = vrot.slane %v366, %v370
    %v389 = vunpack.c.l.b16 %v350
    %v390 = vunpack.c.l.b16 %v351
    %v391 = vunpack.c.l.b16 %v352
    %v392 = vunpack.c.l.b16 %v353
    %v393 = vunpack.c.l.b16 %v354
    %v394 = vunpack.c.l.b16 %v355
    %v395 = vunpack.c.l.b16 %v356
    %v396 = vunpack.c.l.b16 %v357
    %v397 = vunpack.c.l.b16 %v358
    %v398 = vunpack.c.l.b16 %v359
    %v399 = vunpack.c.l.b16 %v360
    %v400 = vunpack.c.l.b16 %v361
    %v401 = vunpack.c.l.b16 %v362
    %v402 = vunpack.c.l.b16 %v363
    %v403 = vunpack.c.l.b16 %v364
    %v404 = vunpack.c.l.b16 %v365
    %v405 = vpack.c.b16 %v390, %v389
    %v406 = vpack.c.b16 %v392, %v391
    %v407 = vpack.c.b16 %v394, %v393
    %v408 = vpack.c.b16 %v396, %v395
    %v409 = vpack.c.b16 %v398, %v397
    %v410 = vpack.c.b16 %v400, %v399
    %v411 = vpack.c.b16 %v402, %v401
    %v412 = vpack.c.b16 %v404, %v403
    %421 = vmatprep.subr.bf16.mxu0 0
    %422 = vmatpush1.bf16.msra.mxu0 %v405
    %423 = vmatprep.subr.bf16.mxu0 0
    %424 = vmatpush1.bf16.msra.mxu0 %v406
    %425 = vmatprep.subr.bf16.mxu0 0
    %426 = vmatpush1.bf16.msra.mxu0 %v407
    %427 = vmatprep.subr.bf16.mxu0 0
    %428 = vmatpush1.bf16.msra.mxu0 %v408
    %429 = vmatprep.subr.bf16.mxu0 0
    %430 = vmatpush1.bf16.msra.mxu0 %v409
    %431 = vmatprep.subr.bf16.mxu0 0
    %432 = vmatpush1.bf16.msra.mxu0 %v410
    %433 = vmatprep.subr.bf16.mxu0 0
    %434 = vmatpush1.bf16.msra.mxu0 %v411
    %435 = vmatprep.subr.bf16.mxu0 0
    %436 = vmatpush1.bf16.msra.mxu0 %v412
    %437 = vmatprep.subr.bf16.mxu0 0
    %438 = vmatpush1.bf16.msra.mxu0 0
    %439 = vmatprep.subr.bf16.mxu0 0
    %440 = vmatpush1.bf16.msra.mxu0 0
    %441 = vmatprep.subr.bf16.mxu0 0
    %442 = vmatpush1.bf16.msra.mxu0 0
    %443 = vmatprep.subr.bf16.mxu0 0
    %444 = vmatpush1.bf16.msra.mxu0 0
    %445 = vmatprep.subr.bf16.mxu0 0
    %446 = vmatpush1.bf16.msra.mxu0 0
    %447 = vmatprep.subr.bf16.mxu0 0
    %448 = vmatpush1.bf16.msra.mxu0 0
    %449 = vmatprep.subr.bf16.mxu0 0
    %450 = vmatpush1.bf16.msra.mxu0 0
    %451 = vmatprep.subr.bf16.mxu0 0
    %452 = vmatpush1.bf16.msra.mxu0 0
    %453 = vmatprep.mubr.bf16.mxu0 0
    %454 = vmatmul.mubr.bf16.gmra.mrb[0].mxu0 %v349
    %v455 = vpop.f32.mrb[0].mxu0
    %v456 = vadd.f32 %v371, %v455
    %v457 = vpop.f32.mrb[0].mxu0
    %v458 = vpop.f32.mrb[0].mxu0
    %v459 = vpop.f32.mrb[0].mxu0
    %460 = vdwg.mxu0
    %v461 = vmax.f32 %v456, 0.0
    %v462 = vpack.c.bf16 %v461, %v461
    %v463 = vld [vmem:[%s5] sm:$0xf]
    %v464 = vld [vmem:[%s5 + $0x4] sm:$0xf]
    %v465 = vld [vmem:[%s5 + $0x8] sm:$0xf]
    %v466 = vld [vmem:[%s5 + $0xc] sm:$0xf]
    %v467 = vld [vmem:[%s5 + $0x10] sm:$0xf]
    %v468 = vld [vmem:[%s5 + $0x14] sm:$0xf]
    %v469 = vld [vmem:[%s5 + $0x18] sm:$0xf]
    %v470 = vld [vmem:[%s5 + $0x1c] sm:$0xf]
    %v471 = vld [vmem:[%s5 + $0x20] sm:$0xf]
    %v472 = vld [vmem:[%s5 + $0x24] sm:$0xf]
    %v473 = vld [vmem:[%s5 + $0x28] sm:$0xf]
    %v474 = vld [vmem:[%s5 + $0x2c] sm:$0xf]
    %v475 = vld [vmem:[%s5 + $0x30] sm:$0xf]
    %v476 = vld [vmem:[%s5 + $0x34] sm:$0xf]
    %v477 = vld [vmem:[%s5 + $0x38] sm:$0xf]
    %v478 = vld [vmem:[%s5 + $0x3c] sm:$0xf]
    %v479 = vld [vmem:[%s6] sm:$0x1]
    %v481 = vlaneseq
    %v482 = vshrl.u32 %v481, 7
    %v483 = vsub.s32 0, %v482
    %v484 = vrot.slane %v479, %v483
    %v502 = vunpack.c.l.b16 %v463
    %v503 = vunpack.c.l.b16 %v464
    %v504 = vunpack.c.l.b16 %v465
    %v505 = vunpack.c.l.b16 %v466
    %v506 = vunpack.c.l.b16 %v467
    %v507 = vunpack.c.l.b16 %v468
    %v508 = vunpack.c.l.b16 %v469
    %v509 = vunpack.c.l.b16 %v470
    %v510 = vunpack.c.l.b16 %v471
    %v511 = vunpack.c.l.b16 %v472
    %v512 = vunpack.c.l.b16 %v473
    %v513 = vunpack.c.l.b16 %v474
    %v514 = vunpack.c.l.b16 %v475
    %v515 = vunpack.c.l.b16 %v476
    %v516 = vunpack.c.l.b16 %v477
    %v517 = vunpack.c.l.b16 %v478
    %v518 = vpack.c.b16 %v503, %v502
    %v519 = vpack.c.b16 %v505, %v504
    %v520 = vpack.c.b16 %v507, %v506
    %v521 = vpack.c.b16 %v509, %v508
    %v522 = vpack.c.b16 %v511, %v510
    %v523 = vpack.c.b16 %v513, %v512
    %v524 = vpack.c.b16 %v515, %v514
    %v525 = vpack.c.b16 %v517, %v516
    %534 = vmatprep.subr.bf16.mxu0 0
    %535 = vmatpush1.bf16.msra.mxu0 %v518
    %536 = vmatprep.subr.bf16.mxu0 0
    %537 = vmatpush1.bf16.msra.mxu0 %v519
    %538 = vmatprep.subr.bf16.mxu0 0
    %539 = vmatpush1.bf16.msra.mxu0 %v520
    %540 = vmatprep.subr.bf16.mxu0 0
    %541 = vmatpush1.bf16.msra.mxu0 %v521
    %542 = vmatprep.subr.bf16.mxu0 0
    %543 = vmatpush1.bf16.msra.mxu0 %v522
    %544 = vmatprep.subr.bf16.mxu0 0
    %545 = vmatpush1.bf16.msra.mxu0 %v523
    %546 = vmatprep.subr.bf16.mxu0 0
    %547 = vmatpush1.bf16.msra.mxu0 %v524
    %548 = vmatprep.subr.bf16.mxu0 0
    %549 = vmatpush1.bf16.msra.mxu0 %v525
    %550 = vmatprep.subr.bf16.mxu0 0
    %551 = vmatpush1.bf16.msra.mxu0 0
    %552 = vmatprep.subr.bf16.mxu0 0
    %553 = vmatpush1.bf16.msra.mxu0 0
    %554 = vmatprep.subr.bf16.mxu0 0
    %555 = vmatpush1.bf16.msra.mxu0 0
    %556 = vmatprep.subr.bf16.mxu0 0
    %557 = vmatpush1.bf16.msra.mxu0 0
    %558 = vmatprep.subr.bf16.mxu0 0
    %559 = vmatpush1.bf16.msra.mxu0 0
    %560 = vmatprep.subr.bf16.mxu0 0
    %561 = vmatpush1.bf16.msra.mxu0 0
    %562 = vmatprep.subr.bf16.mxu0 0
    %563 = vmatpush1.bf16.msra.mxu0 0
    %564 = vmatprep.subr.bf16.mxu0 0
    %565 = vmatpush1.bf16.msra.mxu0 0
    %566 = vmatprep.mubr.bf16.mxu0 0
    %567 = vmatmul.mubr.bf16.gmra.mrb[0].mxu0 %v462
    %v568 = vpop.f32.mrb[0].mxu0
    %v569 = vadd.f32 %v484, %v568
    %v570 = vpop.f32.mrb[0].mxu0
    %v571 = vpop.f32.mrb[0].mxu0
    %v572 = vpop.f32.mrb[0].mxu0
    %573 = vdwg.mxu0
    %574 = vst [vmem:[#allocation2] sm:$0x3] %v569
    // Predicated region
    $region30: #{net_forward.5} parent=1 // pred_check
      _
    $region31: #{net_forward.5} parent=1 // pred_check_branch
      %576 = sbr.rel (0) target = $region33
    $region32: #{net_forward.5} parent=1 // pred_region
      %s578 = ssub.s32 32, 32
      %579 = vsyncadd [#allocation3], %s578
      %s581 = sshll.u32 [#allocation2], 4
      %s582 = int_to_ptr.vmem [resolvable:$true] %s581
      %584 = dma.vmem_to_hbm [thread:$0]  %s582, 32, %s7, [#allocation3]
    $region33: #{net_forward.5} parent=1 // pred_fallthru
      _
    // Predicated region
    $region34: #{net_forward.5} parent=1 // pred_check
      _
    $region35: #{net_forward.5} parent=1 // pred_check_branch
      %586 = sbr.rel (0) target = $region37
    $region36: #{net_forward.5} parent=1 // pred_region
      %587 = dma.done [#allocation3], 32
    $region37: #{net_forward.5} parent=1 // pred_fallthru
      _
    %588 = vsyncpa [#allocation3], 1

</llo_original>
